<compile_context>
chip_gen: v5e
topology: v5e:2x2
jax: 0.10.0
libtpu: 0.0.40
codegen_flags: <defaults>
</compile_context>

<pallas_src>
import functools

import jax
import jax.numpy as jnp
from jax.experimental import pallas as pl
from jax.experimental.pallas import tpu as pltpu


def _round_up(n, m):
    return ((n + m - 1) // m) * m


def _pad2d(x, shape):
    return jnp.pad(x, [(0, shape[0] - x.shape[0]), (0, shape[1] - x.shape[1])])


def _link_predictor_kernel(*refs, num_layers):
    # refs = (xi, xj, w0, b0, w1, b1, ..., w_{L-1}, b_{L-1}, out)
    xi_ref, xj_ref = refs[0], refs[1]
    w_refs = refs[2:2 + 2 * num_layers:2]
    b_refs = refs[3:2 + 2 * num_layers:2]
    o_ref = refs[-1]

    # Elementwise product of the two endpoint embeddings (VPU, bf16).
    x = xi_ref[...] * xj_ref[...]

    h = None
    for li in range(num_layers):
        # MXU matmul with f32 accumulation; weights stay resident in VMEM.
        h = jnp.dot(x, w_refs[li][...], preferred_element_type=jnp.float32)
        h = h + b_refs[li][...]
        if li < num_layers - 1:
            # ReLU; dropout is identity in eval mode.
            # TODO(synk): training-mode dropout (pltpu.prng_random_bits mask).
            x = jnp.maximum(h, 0.0).astype(jnp.bfloat16)
        else:
            h = 1.0 / (1.0 + jnp.exp(-h))  # sigmoid (EUP exp + divide)
    o_ref[...] = h.astype(o_ref.dtype)


def link_predictor_forward(x_i, x_j, params, dropout=0.5, training=False, tm=256):
    """LinkPredictor.forward: sigmoid(MLP(x_i * x_j)).

    params: list of (W [Fin, Fout], b [Fout]) per Linear layer (W already
    transposed from torch's [Fout, Fin] layout, i.e. y = x @ W + b).
    """
    num_layers = len(params)
    e, f_in = x_i.shape
    dims = [f_in] + [w.shape[1] for (w, _) in params]

    # Lane-dense padding: every feature dim -> multiple of 128.
    f_pad = [_round_up(d, 128) for d in dims]
    e_pad = _round_up(max(e, 1), tm)

    xi_p = _pad2d(x_i, (e_pad, f_pad[0])).astype(jnp.bfloat16)
    xj_p = _pad2d(x_j, (e_pad, f_pad[0])).astype(jnp.bfloat16)

    flat_params = []
    for li, (w, b) in enumerate(params):
        w_p = _pad2d(w, (f_pad[li], f_pad[li + 1])).astype(jnp.bfloat16)
        b_p = _pad2d(b.reshape(1, -1), (1, f_pad[li + 1])).astype(jnp.float32)
        flat_params += [w_p, b_p]

    kernel = functools.partial(_link_predictor_kernel, num_layers=num_layers)

    in_specs = [
        pl.BlockSpec((tm, f_pad[0]), lambda i: (i, 0)),  # x_i rows tile
        pl.BlockSpec((tm, f_pad[0]), lambda i: (i, 0)),  # x_j rows tile
    ]
    for li in range(num_layers):
        # Constant index_maps -> weights/biases stay resident in VMEM.
        in_specs.append(pl.BlockSpec((f_pad[li], f_pad[li + 1]), lambda i: (0, 0)))
        in_specs.append(pl.BlockSpec((1, f_pad[li + 1]), lambda i: (0, 0)))

    out = pl.pallas_call(
        kernel,
        out_shape=jax.ShapeDtypeStruct((e_pad, f_pad[-1]), jnp.float32),
        grid=(e_pad // tm,),
        in_specs=in_specs,
        out_specs=pl.BlockSpec((tm, f_pad[-1]), lambda i: (i, 0)),
        compiler_params=pltpu.CompilerParams(
            dimension_semantics=("parallel",),   # v7x: split row tiles across TCs
            vmem_limit_bytes=32 * 1024 * 1024,
        ),
    )(xi_p, xj_p, *flat_params)

    return out[:e, :dims[-1]]


def init_link_predictor_params(key, in_channels, hidden_channels, out_channels,
                               num_layers):
    """torch.nn.Linear-style init: U(-1/sqrt(fan_in), 1/sqrt(fan_in))."""
    dims = [in_channels] + [hidden_channels] * (num_layers - 1) + [out_channels]
    params = []
    for li in range(num_layers):
        f_in, f_out = dims[li], dims[li + 1]
        key, k1, k2 = jax.random.split(key, 3)
        bound = 1.0 / (f_in ** 0.5)
        w = jax.random.uniform(k1, (f_in, f_out), jnp.float32, -bound, bound)
        b = jax.random.uniform(k2, (f_out,), jnp.float32, -bound, bound)
        params.append((w, b))
    return params


if __name__ == "__main__":
    key = jax.random.PRNGKey(0)
    k_i, k_j, k_p = jax.random.split(key, 3)

    # Small shapes consistent with the module: E edge pairs, MLP dims per layer.
    E = 32
    in_channels, hidden_channels, out_channels = 8, 32, 1
    num_layers = 3
    dropout = 0.5

    x_i = jax.random.normal(k_i, (E, in_channels), jnp.float32)
    x_j = jax.random.normal(k_j, (E, in_channels), jnp.float32)
    params = init_link_predictor_params(k_p, in_channels, hidden_channels,
                                        out_channels, num_layers)

    out = link_predictor_forward(x_i, x_j, params, dropout=dropout, training=False)
    out = jax.block_until_ready(out)

    # Pure-JAX f32 reference (same math outside Pallas).
    ref = x_i * x_j
    for li, (w, b) in enumerate(params):
        ref = ref @ w + b
        if li < num_layers - 1:
            ref = jnp.maximum(ref, 0.0)
    ref = jax.nn.sigmoid(ref)

    assert out.shape == (E, out_channels)
    # bf16 MXU inputs with f32 accumulation -> loosened tolerance.
    assert jnp.allclose(out, ref, atol=2e-2, rtol=2e-2), float(
        jnp.max(jnp.abs(out - ref)))

    print("KERNEL_OK")
</pallas_src>

<mosaic_0001>
module attributes {stable_mosaic.version = 11 : i64} {
  func.func @_link_predictor_kernel(%arg0: i32, %arg1: memref<256x128xbf16, #tpu.memory_space<vmem>>, %arg2: memref<256x128xbf16, #tpu.memory_space<vmem>>, %arg3: memref<128x128xbf16, #tpu.memory_space<vmem>>, %arg4: memref<1x128xf32, #tpu.memory_space<vmem>>, %arg5: memref<128x128xbf16, #tpu.memory_space<vmem>>, %arg6: memref<1x128xf32, #tpu.memory_space<vmem>>, %arg7: memref<128x128xbf16, #tpu.memory_space<vmem>>, %arg8: memref<1x128xf32, #tpu.memory_space<vmem>>, %arg9: memref<256x128xf32, #tpu.memory_space<vmem>>) attributes {dimension_semantics = [#tpu.dimension_semantics<parallel>], iteration_bounds = array<i64: 1>, scalar_prefetch = 0 : i64, scratch_operands = 0 : i64, tpu.core_type = #tpu.core_type<tc>, window_params = [{transform_indices = @transform_0, window_bounds = array<i64: 256, 128>}, {transform_indices = @transform_1, window_bounds = array<i64: 256, 128>}, {pipeline_mode = #tpu.pipeline_mode<synchronous>, transform_indices = @transform_2, window_bounds = array<i64: 128, 128>}, {pipeline_mode = #tpu.pipeline_mode<synchronous>, transform_indices = @transform_3, window_bounds = array<i64: 1, 128>}, {pipeline_mode = #tpu.pipeline_mode<synchronous>, transform_indices = @transform_4, window_bounds = array<i64: 128, 128>}, {pipeline_mode = #tpu.pipeline_mode<synchronous>, transform_indices = @transform_5, window_bounds = array<i64: 1, 128>}, {pipeline_mode = #tpu.pipeline_mode<synchronous>, transform_indices = @transform_6, window_bounds = array<i64: 128, 128>}, {pipeline_mode = #tpu.pipeline_mode<synchronous>, transform_indices = @transform_7, window_bounds = array<i64: 1, 128>}, {transform_indices = @transform_8, window_bounds = array<i64: 256, 128>}]} {
    %c0 = arith.constant 0 : index
    %c0_0 = arith.constant 0 : index
    %0 = vector.load %arg1[%c0, %c0_0] : memref<256x128xbf16, #tpu.memory_space<vmem>>, vector<256x128xbf16>
    %c0_1 = arith.constant 0 : index
    %c0_2 = arith.constant 0 : index
    %1 = vector.load %arg2[%c0_1, %c0_2] : memref<256x128xbf16, #tpu.memory_space<vmem>>, vector<256x128xbf16>
    %2 = arith.mulf %0, %1 : vector<256x128xbf16>
    %c0_3 = arith.constant 0 : index
    %c0_4 = arith.constant 0 : index
    %3 = vector.load %arg3[%c0_3, %c0_4] : memref<128x128xbf16, #tpu.memory_space<vmem>>, vector<128x128xbf16>
    %cst = arith.constant dense<0.000000e+00> : vector<256x128xf32>
    %4 = tpu.matmul %2, %3, %cst {dimension_numbers = #tpu.dot_dimension_numbers<[1], [0], [0], [1], [0, 0, 1, 1], [], []>} : vector<256x128xbf16>, vector<128x128xbf16>, vector<256x128xf32> -> vector<256x128xf32>
    %c0_5 = arith.constant 0 : index
    %c0_6 = arith.constant 0 : index
    %5 = vector.load %arg4[%c0_5, %c0_6] : memref<1x128xf32, #tpu.memory_space<vmem>>, vector<1x128xf32>
    %6 = vector.broadcast %5 : vector<1x128xf32> to vector<256x128xf32>
    %7 = arith.addf %4, %6 : vector<256x128xf32>
    %cst_7 = arith.constant 0.000000e+00 : f32
    %8 = vector.broadcast %cst_7 : f32 to vector<256x128xf32>
    %9 = arith.maximumf %7, %8 : vector<256x128xf32>
    %10 = arith.truncf %9 : vector<256x128xf32> to vector<256x128xbf16>
    %c0_8 = arith.constant 0 : index
    %c0_9 = arith.constant 0 : index
    %11 = vector.load %arg5[%c0_8, %c0_9] : memref<128x128xbf16, #tpu.memory_space<vmem>>, vector<128x128xbf16>
    %cst_10 = arith.constant dense<0.000000e+00> : vector<256x128xf32>
    %12 = tpu.matmul %10, %11, %cst_10 {dimension_numbers = #tpu.dot_dimension_numbers<[1], [0], [0], [1], [0, 0, 1, 1], [], []>} : vector<256x128xbf16>, vector<128x128xbf16>, vector<256x128xf32> -> vector<256x128xf32>
    %c0_11 = arith.constant 0 : index
    %c0_12 = arith.constant 0 : index
    %13 = vector.load %arg6[%c0_11, %c0_12] : memref<1x128xf32, #tpu.memory_space<vmem>>, vector<1x128xf32>
    %14 = vector.broadcast %13 : vector<1x128xf32> to vector<256x128xf32>
    %15 = arith.addf %12, %14 : vector<256x128xf32>
    %cst_13 = arith.constant 0.000000e+00 : f32
    %16 = vector.broadcast %cst_13 : f32 to vector<256x128xf32>
    %17 = arith.maximumf %15, %16 : vector<256x128xf32>
    %18 = arith.truncf %17 : vector<256x128xf32> to vector<256x128xbf16>
    %c0_14 = arith.constant 0 : index
    %c0_15 = arith.constant 0 : index
    %19 = vector.load %arg7[%c0_14, %c0_15] : memref<128x128xbf16, #tpu.memory_space<vmem>>, vector<128x128xbf16>
    %cst_16 = arith.constant dense<0.000000e+00> : vector<256x128xf32>
    %20 = tpu.matmul %18, %19, %cst_16 {dimension_numbers = #tpu.dot_dimension_numbers<[1], [0], [0], [1], [0, 0, 1, 1], [], []>} : vector<256x128xbf16>, vector<128x128xbf16>, vector<256x128xf32> -> vector<256x128xf32>
    %c0_17 = arith.constant 0 : index
    %c0_18 = arith.constant 0 : index
    %21 = vector.load %arg8[%c0_17, %c0_18] : memref<1x128xf32, #tpu.memory_space<vmem>>, vector<1x128xf32>
    %22 = vector.broadcast %21 : vector<1x128xf32> to vector<256x128xf32>
    %23 = arith.addf %20, %22 : vector<256x128xf32>
    %cst_19 = arith.constant 0.000000e+00 : f32
    %24 = vector.broadcast %cst_19 : f32 to vector<256x128xf32>
    %25 = arith.subf %24, %23 : vector<256x128xf32>
    %26 = math.exp %25 : vector<256x128xf32>
    %cst_20 = arith.constant 1.000000e+00 : f32
    %27 = vector.broadcast %cst_20 : f32 to vector<256x128xf32>
    %28 = arith.addf %27, %26 : vector<256x128xf32>
    %cst_21 = arith.constant 1.000000e+00 : f32
    %29 = vector.broadcast %cst_21 : f32 to vector<256x128xf32>
    %30 = arith.divf %29, %28 : vector<256x128xf32>
    %c0_22 = arith.constant 0 : index
    %c0_23 = arith.constant 0 : index
    %31 = vector.load %arg9[%c0_22, %c0_23] : memref<256x128xf32, #tpu.memory_space<vmem>>, vector<256x128xf32>
    tpu.vector_store %arg9[%c0_22, %c0_23], %30 {strides = array<i32>} : memref<256x128xf32, #tpu.memory_space<vmem>>, vector<256x128xf32>,
    return
  }
  func.func @transform_0(%arg0: i32) -> (i32, i32) {
    %c0_i32 = arith.constant 0 : i32
    %c0_i32_0 = arith.constant 0 : i32
    return %arg0, %c0_i32 : i32, i32
  }
  func.func @transform_1(%arg0: i32) -> (i32, i32) {
    %c0_i32 = arith.constant 0 : i32
    %c0_i32_0 = arith.constant 0 : i32
    return %arg0, %c0_i32 : i32, i32
  }
  func.func @transform_2(%arg0: i32) -> (i32, i32) {
    %c0_i32 = arith.constant 0 : i32
    %c0_i32_0 = arith.constant 0 : i32
    %c0_i32_1 = arith.constant 0 : i32
    return %c0_i32, %c0_i32_0 : i32, i32
  }
  func.func @transform_3(%arg0: i32) -> (i32, i32) {
    %c0_i32 = arith.constant 0 : i32
    %c0_i32_0 = arith.constant 0 : i32
    %c0_i32_1 = arith.constant 0 : i32
    return %c0_i32, %c0_i32_0 : i32, i32
  }
  func.func @transform_4(%arg0: i32) -> (i32, i32) {
    %c0_i32 = arith.constant 0 : i32
    %c0_i32_0 = arith.constant 0 : i32
    %c0_i32_1 = arith.constant 0 : i32
    return %c0_i32, %c0_i32_0 : i32, i32
  }
  func.func @transform_5(%arg0: i32) -> (i32, i32) {
    %c0_i32 = arith.constant 0 : i32
    %c0_i32_0 = arith.constant 0 : i32
    %c0_i32_1 = arith.constant 0 : i32
    return %c0_i32, %c0_i32_0 : i32, i32
  }
  func.func @transform_6(%arg0: i32) -> (i32, i32) {
    %c0_i32 = arith.constant 0 : i32
    %c0_i32_0 = arith.constant 0 : i32
    %c0_i32_1 = arith.constant 0 : i32
    return %c0_i32, %c0_i32_0 : i32, i32
  }
  func.func @transform_7(%arg0: i32) -> (i32, i32) {
    %c0_i32 = arith.constant 0 : i32
    %c0_i32_0 = arith.constant 0 : i32
    %c0_i32_1 = arith.constant 0 : i32
    return %c0_i32, %c0_i32_0 : i32, i32
  }
  func.func @transform_8(%arg0: i32) -> (i32, i32) {
    %c0_i32 = arith.constant 0 : i32
    %c0_i32_0 = arith.constant 0 : i32
    return %arg0, %c0_i32 : i32, i32
  }
}

</mosaic_0001>

<llo_original>
// kernel: tpu_custom_call.1
$region0: #{tpu_custom_call.1}
  #allocation0 [shape = 'u32[]', space=smem, size = 0x4, offset = 0x4, fixed_abs, tag = 'smem constant byte address 0x4 - core index']
  #allocation1 [shape = 'u32[72,128]{1,0:T(1,128)}', space=vmem, size = 0x9000, scoped, tag = 'internal scratch']
  %s0 = inlined_call_operand.hbm [shape: bf16[256,128], index: 0, kind: input, shape index: {}]
  %s1 = inlined_call_operand.hbm [shape: bf16[256,128], index: 1, kind: input, shape index: {}]
  %s2 = inlined_call_operand.hbm [shape: bf16[128,128], index: 2, kind: input, shape index: {}]
  %s3 = inlined_call_operand.vmem [shape: f32[1,128], index: 3, kind: input, shape index: {}]
  %s4 = inlined_call_operand.hbm [shape: bf16[128,128], index: 4, kind: input, shape index: {}]
  %s5 = inlined_call_operand.vmem [shape: f32[1,128], index: 5, kind: input, shape index: {}]
  %s6 = inlined_call_operand.hbm [shape: bf16[128,128], index: 6, kind: input, shape index: {}]
  %s7 = inlined_call_operand.vmem [shape: f32[1,128], index: 7, kind: input, shape index: {}]
  %s8 = inlined_call_operand.hbm [shape: f32[256,128], index: 8, kind: output, shape index: {}]
  %s9 = sld [smem:[#allocation0]]
  $region62: #{tpu_custom_call.1} parent=0
    _
  %s11 = ssub.s32 1, %s9
  %s12 = scalar_select 0, %s11, %s9
  $region1: #{tpu_custom_call.1} parent=0
    #allocation2 [shape = 'u8[65536]{0}', space=vmem, size = 0x10000, scoped, tag = 'input window, operand 0, single buffered']
    #allocation3 [shape = 's32[1]{0}', space=sflag, size = 0x4, scoped, tag = 'scoped memory for tpu_custom_call.1']
    #allocation4 [shape = 's32[1]{0}', space=sflag, size = 0x4, scoped, tag = 'scoped memory for tpu_custom_call.1']
    #allocation5 [shape = 'u8[65536]{0}', space=vmem, size = 0x10000, scoped, tag = 'input window, operand 1, single buffered']
    #allocation6 [shape = 's32[1]{0}', space=sflag, size = 0x4, scoped, tag = 'scoped memory for tpu_custom_call.1']
    #allocation7 [shape = 'u8[32768]{0}', space=vmem, size = 0x8000, scoped, tag = 'input window, operand 2, single buffered']
    #allocation8 [shape = 'u8[32768]{0}', space=vmem, size = 0x8000, scoped, tag = 'input window, operand 4, single buffered']
    #allocation9 [shape = 's32[1]{0}', space=sflag, size = 0x4, scoped, tag = 'scoped memory for tpu_custom_call.1']
    #allocation10 [shape = 'u8[32768]{0}', space=vmem, size = 0x8000, scoped, tag = 'input window, operand 6, single buffered']
    #allocation11 [shape = 'u8[131072]{0}', space=vmem, size = 0x20000, scoped, tag = 'output window, operand 0, single buffered']
    %13 = vsyncpa [#allocation3], 0
    %14 = vsyncpa [#allocation6], 0
    %15 = vsyncpa [#allocation9], 0
    %16 = vsyncpa [#allocation4], 0
    // Predicated region
    $region2: #{tpu_custom_call.1} parent=1 // pred_check
      _
    $region3: #{tpu_custom_call.1} parent=1 // pred_check_branch
      %18 = sbr.rel (0) target = $region5
    $region4: #{tpu_custom_call.1} parent=1 // pred_region
      %20 = vsyncadd [#allocation3], 0
      %s21 = sshll.u32 %s0, 4
      %s22 = int_to_ptr.hbm [resolvable:$true] %s21
      %s23 = sshll.u32 [#allocation2], 4
      %s24 = int_to_ptr.vmem [resolvable:$true] %s23
      %29 = dma.hbm_to_vmem [thread:$0]  %s22, 2048, %s24, [#allocation3], 64, 64, 4
    $region5: #{tpu_custom_call.1} parent=1 // pred_fallthru
      _
    // Predicated region
    $region6: #{tpu_custom_call.1} parent=1 // pred_check
      _
    $region7: #{tpu_custom_call.1} parent=1 // pred_check_branch
      %31 = sbr.rel (0) target = $region9
    $region8: #{tpu_custom_call.1} parent=1 // pred_region
      %33 = vsyncadd [#allocation6], 0
      %s34 = sshll.u32 %s1, 4
      %s35 = int_to_ptr.hbm [resolvable:$true] %s34
      %s36 = sshll.u32 [#allocation5], 4
      %s37 = int_to_ptr.vmem [resolvable:$true] %s36
      %42 = dma.hbm_to_vmem [thread:$0]  %s35, 2048, %s37, [#allocation6], 64, 64, 4
    $region9: #{tpu_custom_call.1} parent=1 // pred_fallthru
      _
    // Predicated region
    $region10: #{tpu_custom_call.1} parent=1 // pred_check
      _
    $region11: #{tpu_custom_call.1} parent=1 // pred_check_branch
      %44 = sbr.rel (0) target = $region13
    $region12: #{tpu_custom_call.1} parent=1 // pred_region
      %46 = vsyncadd [#allocation6], 0
      %s47 = sshll.u32 %s2, 4
      %s48 = int_to_ptr.hbm [resolvable:$true] %s47
      %s49 = sshll.u32 [#allocation7], 4
      %s50 = int_to_ptr.vmem [resolvable:$true] %s49
      %55 = dma.hbm_to_vmem [thread:$0]  %s48, 1024, %s50, [#allocation6], 64, 64, 4
    $region13: #{tpu_custom_call.1} parent=1 // pred_fallthru
      _
    // Predicated region
    $region14: #{tpu_custom_call.1} parent=1 // pred_check
      _
    $region15: #{tpu_custom_call.1} parent=1 // pred_check_branch
      %57 = sbr.rel (0) target = $region17
    $region16: #{tpu_custom_call.1} parent=1 // pred_region
      _
    $region17: #{tpu_custom_call.1} parent=1 // pred_fallthru
      _
    // Predicated region
    $region18: #{tpu_custom_call.1} parent=1 // pred_check
      _
    $region19: #{tpu_custom_call.1} parent=1 // pred_check_branch
      %59 = sbr.rel (0) target = $region21
    $region20: #{tpu_custom_call.1} parent=1 // pred_region
      %61 = vsyncadd [#allocation9], 0
      %s62 = sshll.u32 %s4, 4
      %s63 = int_to_ptr.hbm [resolvable:$true] %s62
      %s64 = sshll.u32 [#allocation8], 4
      %s65 = int_to_ptr.vmem [resolvable:$true] %s64
      %70 = dma.hbm_to_vmem [thread:$0]  %s63, 1024, %s65, [#allocation9], 64, 64, 4
    $region21: #{tpu_custom_call.1} parent=1 // pred_fallthru
      _
    // Predicated region
    $region22: #{tpu_custom_call.1} parent=1 // pred_check
      _
    $region23: #{tpu_custom_call.1} parent=1 // pred_check_branch
      %72 = sbr.rel (0) target = $region25
    $region24: #{tpu_custom_call.1} parent=1 // pred_region
      _
    $region25: #{tpu_custom_call.1} parent=1 // pred_fallthru
      _
    // Predicated region
    $region26: #{tpu_custom_call.1} parent=1 // pred_check
      _
    $region27: #{tpu_custom_call.1} parent=1 // pred_check_branch
      %74 = sbr.rel (0) target = $region29
    $region28: #{tpu_custom_call.1} parent=1 // pred_region
      %76 = vsyncadd [#allocation9], 0
      %s77 = sshll.u32 %s6, 4
      %s78 = int_to_ptr.hbm [resolvable:$true] %s77
      %s79 = sshll.u32 [#allocation10], 4
      %s80 = int_to_ptr.vmem [resolvable:$true] %s79
      %85 = dma.hbm_to_vmem [thread:$0]  %s78, 1024, %s80, [#allocation9], 64, 64, 4
    $region29: #{tpu_custom_call.1} parent=1 // pred_fallthru
      _
    // Predicated region
    $region30: #{tpu_custom_call.1} parent=1 // pred_check
      _
    $region31: #{tpu_custom_call.1} parent=1 // pred_check_branch
      %87 = sbr.rel (0) target = $region33
    $region32: #{tpu_custom_call.1} parent=1 // pred_region
      _
    $region33: #{tpu_custom_call.1} parent=1 // pred_fallthru
      _
    // Predicated region
    $region34: #{tpu_custom_call.1} parent=1 // pred_check
      _
    $region35: #{tpu_custom_call.1} parent=1 // pred_check_branch
      %89 = sbr.rel (0) target = $region37
    $region36: #{tpu_custom_call.1} parent=1 // pred_region
      %91 = dma.done [#allocation3], 2048
    $region37: #{tpu_custom_call.1} parent=1 // pred_fallthru
      _
    // Predicated region
    $region38: #{tpu_custom_call.1} parent=1 // pred_check
      _
    $region39: #{tpu_custom_call.1} parent=1 // pred_check_branch
      %93 = sbr.rel (0) target = $region41
    $region40: #{tpu_custom_call.1} parent=1 // pred_region
      %95 = dma.done [#allocation6], 2048
    $region41: #{tpu_custom_call.1} parent=1 // pred_fallthru
      _
    // Predicated region
    $region42: #{tpu_custom_call.1} parent=1 // pred_check
      _
    $region43: #{tpu_custom_call.1} parent=1 // pred_check_branch
      %97 = sbr.rel (0) target = $region45
    $region44: #{tpu_custom_call.1} parent=1 // pred_region
      %99 = dma.done [#allocation6], 1024
    $region45: #{tpu_custom_call.1} parent=1 // pred_fallthru
      _
    // Predicated region
    $region46: #{tpu_custom_call.1} parent=1 // pred_check
      _
    $region47: #{tpu_custom_call.1} parent=1 // pred_check_branch
      %101 = sbr.rel (0) target = $region49
    $region48: #{tpu_custom_call.1} parent=1 // pred_region
      %103 = dma.done [#allocation9], 1024
    $region49: #{tpu_custom_call.1} parent=1 // pred_fallthru
      _
    // Predicated region
    $region50: #{tpu_custom_call.1} parent=1 // pred_check
      _
    $region51: #{tpu_custom_call.1} parent=1 // pred_check_branch
      %105 = sbr.rel (0) target = $region53
    $region52: #{tpu_custom_call.1} parent=1 // pred_region
      %107 = dma.done [#allocation9], 1024
    $region53: #{tpu_custom_call.1} parent=1 // pred_fallthru
      _
    %v108 = vld [vmem:[#allocation2] sm:$0xf]
    %v109 = vld [vmem:[#allocation2 + $0x4] sm:$0xf]
    %v110 = vld [vmem:[#allocation2 + $0x8] sm:$0xf]
    %v111 = vld [vmem:[#allocation2 + $0xc] sm:$0xf]
    %v112 = vld [vmem:[#allocation2 + $0x10] sm:$0xf]
    %v113 = vld [vmem:[#allocation2 + $0x14] sm:$0xf]
    %v114 = vld [vmem:[#allocation2 + $0x18] sm:$0xf]
    %v115 = vld [vmem:[#allocation2 + $0x1c] sm:$0xf]
    %v116 = vld [vmem:[#allocation2 + $0x20] sm:$0xf]
    %v117 = vld [vmem:[#allocation2 + $0x24] sm:$0xf]
    %v118 = vld [vmem:[#allocation2 + $0x28] sm:$0xf]
    %v119 = vld [vmem:[#allocation2 + $0x2c] sm:$0xf]
    %v120 = vld [vmem:[#allocation2 + $0x30] sm:$0xf]
    %v121 = vld [vmem:[#allocation2 + $0x34] sm:$0xf]
    %v122 = vld [vmem:[#allocation2 + $0x38] sm:$0xf]
    %v123 = vld [vmem:[#allocation2 + $0x3c] sm:$0xf]
    %v124 = vld [vmem:[#allocation2 + $0x40] sm:$0xf]
    %v125 = vld [vmem:[#allocation2 + $0x44] sm:$0xf]
    %v126 = vld [vmem:[#allocation2 + $0x48] sm:$0xf]
    %v127 = vld [vmem:[#allocation2 + $0x4c] sm:$0xf]
    %v128 = vld [vmem:[#allocation2 + $0x50] sm:$0xf]
    %v129 = vld [vmem:[#allocation2 + $0x54] sm:$0xf]
    %v130 = vld [vmem:[#allocation2 + $0x58] sm:$0xf]
    %v131 = vld [vmem:[#allocation2 + $0x5c] sm:$0xf]
    %v132 = vld [vmem:[#allocation2 + $0x60] sm:$0xf]
    %v133 = vld [vmem:[#allocation2 + $0x64] sm:$0xf]
    %v134 = vld [vmem:[#allocation2 + $0x68] sm:$0xf]
    %v135 = vld [vmem:[#allocation2 + $0x6c] sm:$0xf]
    %v136 = vld [vmem:[#allocation2 + $0x70] sm:$0xf]
    %v137 = vld [vmem:[#allocation2 + $0x74] sm:$0xf]
    %v138 = vld [vmem:[#allocation2 + $0x78] sm:$0xf]
    %v139 = vld [vmem:[#allocation2 + $0x7c] sm:$0xf]
    %v140 = vld [vmem:[#allocation5] sm:$0xf]
    %v141 = vld [vmem:[#allocation5 + $0x4] sm:$0xf]
    %v142 = vld [vmem:[#allocation5 + $0x8] sm:$0xf]
    %v143 = vld [vmem:[#allocation5 + $0xc] sm:$0xf]
    %v144 = vld [vmem:[#allocation5 + $0x10] sm:$0xf]
    %v145 = vld [vmem:[#allocation5 + $0x14] sm:$0xf]
    %v146 = vld [vmem:[#allocation5 + $0x18] sm:$0xf]
    %v147 = vld [vmem:[#allocation5 + $0x1c] sm:$0xf]
    %v148 = vld [vmem:[#allocation5 + $0x20] sm:$0xf]
    %v149 = vld [vmem:[#allocation5 + $0x24] sm:$0xf]
    %v150 = vld [vmem:[#allocation5 + $0x28] sm:$0xf]
    %v151 = vld [vmem:[#allocation5 + $0x2c] sm:$0xf]
    %v152 = vld [vmem:[#allocation5 + $0x30] sm:$0xf]
    %v153 = vld [vmem:[#allocation5 + $0x34] sm:$0xf]
    %v154 = vld [vmem:[#allocation5 + $0x38] sm:$0xf]
    %v155 = vld [vmem:[#allocation5 + $0x3c] sm:$0xf]
    %v156 = vld [vmem:[#allocation5 + $0x40] sm:$0xf]
    %v157 = vld [vmem:[#allocation5 + $0x44] sm:$0xf]
    %v158 = vld [vmem:[#allocation5 + $0x48] sm:$0xf]
    %v159 = vld [vmem:[#allocation5 + $0x4c] sm:$0xf]
    %v160 = vld [vmem:[#allocation5 + $0x50] sm:$0xf]
    %v161 = vld [vmem:[#allocation5 + $0x54] sm:$0xf]
    %v162 = vld [vmem:[#allocation5 + $0x58] sm:$0xf]
    %v163 = vld [vmem:[#allocation5 + $0x5c] sm:$0xf]
    %v164 = vld [vmem:[#allocation5 + $0x60] sm:$0xf]
    %v165 = vld [vmem:[#allocation5 + $0x64] sm:$0xf]
    %v166 = vld [vmem:[#allocation5 + $0x68] sm:$0xf]
    %v167 = vld [vmem:[#allocation5 + $0x6c] sm:$0xf]
    %v168 = vld [vmem:[#allocation5 + $0x70] sm:$0xf]
    %v169 = vld [vmem:[#allocation5 + $0x74] sm:$0xf]
    %v170 = vld [vmem:[#allocation5 + $0x78] sm:$0xf]
    %v171 = vld [vmem:[#allocation5 + $0x7c] sm:$0xf]
    %v172 = vunpack.c.l.bf16 %v108
    %v173 = vunpack.c.l.bf16 %v109
    %v174 = vunpack.c.l.bf16 %v110
    %v175 = vunpack.c.l.bf16 %v111
    %v176 = vunpack.c.l.bf16 %v112
    %v177 = vunpack.c.l.bf16 %v113
    %v178 = vunpack.c.l.bf16 %v114
    %v179 = vunpack.c.l.bf16 %v115
    %v180 = vunpack.c.l.bf16 %v116
    %v181 = vunpack.c.l.bf16 %v117
    %v182 = vunpack.c.l.bf16 %v118
    %v183 = vunpack.c.l.bf16 %v119
    %v184 = vunpack.c.l.bf16 %v120
    %v185 = vunpack.c.l.bf16 %v121
    %v186 = vunpack.c.l.bf16 %v122
    %v187 = vunpack.c.l.bf16 %v123
    %v188 = vunpack.c.l.bf16 %v124
    %v189 = vunpack.c.l.bf16 %v125
    %v190 = vunpack.c.l.bf16 %v126
    %v191 = vunpack.c.l.bf16 %v127
    %v192 = vunpack.c.l.bf16 %v128
    %v193 = vunpack.c.l.bf16 %v129
    %v194 = vunpack.c.l.bf16 %v130
    %v195 = vunpack.c.l.bf16 %v131
    %v196 = vunpack.c.l.bf16 %v132
    %v197 = vunpack.c.l.bf16 %v133
    %v198 = vunpack.c.l.bf16 %v134
    %v199 = vunpack.c.l.bf16 %v135
    %v200 = vunpack.c.l.bf16 %v136
    %v201 = vunpack.c.l.bf16 %v137
    %v202 = vunpack.c.l.bf16 %v138
    %v203 = vunpack.c.l.bf16 %v139
    %v204 = vunpack.c.l.bf16 %v140
    %v205 = vunpack.c.l.bf16 %v141
    %v206 = vunpack.c.l.bf16 %v142
    %v207 = vunpack.c.l.bf16 %v143
    %v208 = vunpack.c.l.bf16 %v144
    %v209 = vunpack.c.l.bf16 %v145
    %v210 = vunpack.c.l.bf16 %v146
    %v211 = vunpack.c.l.bf16 %v147
    %v212 = vunpack.c.l.bf16 %v148
    %v213 = vunpack.c.l.bf16 %v149
    %v214 = vunpack.c.l.bf16 %v150
    %v215 = vunpack.c.l.bf16 %v151
    %v216 = vunpack.c.l.bf16 %v152
    %v217 = vunpack.c.l.bf16 %v153
    %v218 = vunpack.c.l.bf16 %v154
    %v219 = vunpack.c.l.bf16 %v155
    %v220 = vunpack.c.l.bf16 %v156
    %v221 = vunpack.c.l.bf16 %v157
    %v222 = vunpack.c.l.bf16 %v158
    %v223 = vunpack.c.l.bf16 %v159
    %v224 = vunpack.c.l.bf16 %v160
    %v225 = vunpack.c.l.bf16 %v161
    %v226 = vunpack.c.l.bf16 %v162
    %v227 = vunpack.c.l.bf16 %v163
    %v228 = vunpack.c.l.bf16 %v164
    %v229 = vunpack.c.l.bf16 %v165
    %v230 = vunpack.c.l.bf16 %v166
    %v231 = vunpack.c.l.bf16 %v167
    %v232 = vunpack.c.l.bf16 %v168
    %v233 = vunpack.c.l.bf16 %v169
    %v234 = vunpack.c.l.bf16 %v170
    %v235 = vunpack.c.l.bf16 %v171
    %v236 = vmul.f32 %v172, %v204
    %v237 = vmul.f32 %v173, %v205
    %v238 = vmul.f32 %v174, %v206
    %v239 = vmul.f32 %v175, %v207
    %v240 = vmul.f32 %v176, %v208
    %v241 = vmul.f32 %v177, %v209
    %v242 = vmul.f32 %v178, %v210
    %v243 = vmul.f32 %v179, %v211
    %v244 = vmul.f32 %v180, %v212
    %v245 = vmul.f32 %v181, %v213
    %v246 = vmul.f32 %v182, %v214
    %v247 = vmul.f32 %v183, %v215
    %v248 = vmul.f32 %v184, %v216
    %v249 = vmul.f32 %v185, %v217
    %v250 = vmul.f32 %v186, %v218
    %v251 = vmul.f32 %v187, %v219
    %v252 = vmul.f32 %v188, %v220
    %v253 = vmul.f32 %v189, %v221
    %v254 = vmul.f32 %v190, %v222
    %v255 = vmul.f32 %v191, %v223
    %v256 = vmul.f32 %v192, %v224
    %v257 = vmul.f32 %v193, %v225
    %v258 = vmul.f32 %v194, %v226
    %v259 = vmul.f32 %v195, %v227
    %v260 = vmul.f32 %v196, %v228
    %v261 = vmul.f32 %v197, %v229
    %v262 = vmul.f32 %v198, %v230
    %v263 = vmul.f32 %v199, %v231
    %v264 = vmul.f32 %v200, %v232
    %v265 = vmul.f32 %v201, %v233
    %v266 = vmul.f32 %v202, %v234
    %v267 = vmul.f32 %v203, %v235
    %v268 = vpack.c.bf16 %v237, %v236
    %v269 = vpack.c.bf16 %v239, %v238
    %v270 = vpack.c.bf16 %v241, %v240
    %v271 = vpack.c.bf16 %v243, %v242
    %v272 = vpack.c.bf16 %v245, %v244
    %v273 = vpack.c.bf16 %v247, %v246
    %v274 = vpack.c.bf16 %v249, %v248
    %v275 = vpack.c.bf16 %v251, %v250
    %v276 = vpack.c.bf16 %v253, %v252
    %v277 = vpack.c.bf16 %v255, %v254
    %v278 = vpack.c.bf16 %v257, %v256
    %v279 = vpack.c.bf16 %v259, %v258
    %v280 = vpack.c.bf16 %v261, %v260
    %v281 = vpack.c.bf16 %v263, %v262
    %v282 = vpack.c.bf16 %v265, %v264
    %v283 = vpack.c.bf16 %v267, %v266
    %v284 = vld [vmem:[#allocation7] sm:$0xf]
    %v285 = vld [vmem:[#allocation7 + $0x4] sm:$0xf]
    %v286 = vld [vmem:[#allocation7 + $0x8] sm:$0xf]
    %v287 = vld [vmem:[#allocation7 + $0xc] sm:$0xf]
    %v288 = vld [vmem:[#allocation7 + $0x10] sm:$0xf]
    %v289 = vld [vmem:[#allocation7 + $0x14] sm:$0xf]
    %v290 = vld [vmem:[#allocation7 + $0x18] sm:$0xf]
    %v291 = vld [vmem:[#allocation7 + $0x1c] sm:$0xf]
    %v292 = vld [vmem:[#allocation7 + $0x20] sm:$0xf]
    %v293 = vld [vmem:[#allocation7 + $0x24] sm:$0xf]
    %v294 = vld [vmem:[#allocation7 + $0x28] sm:$0xf]
    %v295 = vld [vmem:[#allocation7 + $0x2c] sm:$0xf]
    %v296 = vld [vmem:[#allocation7 + $0x30] sm:$0xf]
    %v297 = vld [vmem:[#allocation7 + $0x34] sm:$0xf]
    %v298 = vld [vmem:[#allocation7 + $0x38] sm:$0xf]
    %v299 = vld [vmem:[#allocation7 + $0x3c] sm:$0xf]
    %v300 = vld [vmem:[%s3] sm:$0x1]
    %v302 = vperm.slane %v300, 0
    %v320 = vunpack.c.l.b16 %v284
    %v321 = vunpack.c.l.b16 %v285
    %v322 = vunpack.c.l.b16 %v286
    %v323 = vunpack.c.l.b16 %v287
    %v324 = vunpack.c.l.b16 %v288
    %v325 = vunpack.c.l.b16 %v289
    %v326 = vunpack.c.l.b16 %v290
    %v327 = vunpack.c.l.b16 %v291
    %v328 = vunpack.c.l.b16 %v292
    %v329 = vunpack.c.l.b16 %v293
    %v330 = vunpack.c.l.b16 %v294
    %v331 = vunpack.c.l.b16 %v295
    %v332 = vunpack.c.l.b16 %v296
    %v333 = vunpack.c.l.b16 %v297
    %v334 = vunpack.c.l.b16 %v298
    %v335 = vunpack.c.l.b16 %v299
    %v336 = vpack.c.b16 %v321, %v320
    %v337 = vpack.c.b16 %v323, %v322
    %v338 = vpack.c.b16 %v325, %v324
    %v339 = vpack.c.b16 %v327, %v326
    %v340 = vpack.c.b16 %v329, %v328
    %v341 = vpack.c.b16 %v331, %v330
    %v342 = vpack.c.b16 %v333, %v332
    %v343 = vpack.c.b16 %v335, %v334
    %352 = vmatpush.bf16.msra.mxu0 %v343
    %353 = vmatpush.bf16.msra.mxu0 %v342
    %354 = vmatpush.bf16.msra.mxu0 %v341
    %355 = vmatpush.bf16.msra.mxu0 %v340
    %356 = vmatpush.bf16.msra.mxu0 %v339
    %357 = vmatpush.bf16.msra.mxu0 %v338
    %358 = vmatpush.bf16.msra.mxu0 %v337
    %359 = vmatpush.bf16.msra.mxu0 %v336
    %360 = vmatmul.bf16.gmra.mxu0 %v268
    %v361 = vpop.f32.mrf.mxu0
    %v362 = vadd.f32 %v302, %v361
    %v363 = vpop.f32.mrf.mxu0
    %v364 = vadd.f32 %v302, %v363
    %365 = vmatmul.bf16.gmra.mxu0 %v269
    %v366 = vpop.f32.mrf.mxu0
    %v367 = vadd.f32 %v302, %v366
    %v368 = vpop.f32.mrf.mxu0
    %v369 = vadd.f32 %v302, %v368
    %370 = vmatmul.bf16.gmra.mxu0 %v270
    %v371 = vpop.f32.mrf.mxu0
    %v372 = vadd.f32 %v302, %v371
    %v373 = vpop.f32.mrf.mxu0
    %v374 = vadd.f32 %v302, %v373
    %375 = vmatmul.bf16.gmra.mxu0 %v271
    %v376 = vpop.f32.mrf.mxu0
    %v377 = vadd.f32 %v302, %v376
    %v378 = vpop.f32.mrf.mxu0
    %v379 = vadd.f32 %v302, %v378
    %380 = vmatmul.bf16.gmra.mxu0 %v272
    %v381 = vpop.f32.mrf.mxu0
    %v382 = vadd.f32 %v302, %v381
    %v383 = vpop.f32.mrf.mxu0
    %v384 = vadd.f32 %v302, %v383
    %385 = vmatmul.bf16.gmra.mxu0 %v273
    %v386 = vpop.f32.mrf.mxu0
    %v387 = vadd.f32 %v302, %v386
    %v388 = vpop.f32.mrf.mxu0
    %v389 = vadd.f32 %v302, %v388
    %390 = vmatmul.bf16.gmra.mxu0 %v274
    %v391 = vpop.f32.mrf.mxu0
    %v392 = vadd.f32 %v302, %v391
    %v393 = vpop.f32.mrf.mxu0
    %v394 = vadd.f32 %v302, %v393
    %395 = vmatmul.bf16.gmra.mxu0 %v275
    %v396 = vpop.f32.mrf.mxu0
    %v397 = vadd.f32 %v302, %v396
    %v398 = vpop.f32.mrf.mxu0
    %v399 = vadd.f32 %v302, %v398
    %400 = vmatmul.bf16.gmra.mxu0 %v276
    %v401 = vpop.f32.mrf.mxu0
    %v402 = vadd.f32 %v302, %v401
    %v403 = vpop.f32.mrf.mxu0
    %v404 = vadd.f32 %v302, %v403
    %405 = vmatmul.bf16.gmra.mxu0 %v277
    %v406 = vpop.f32.mrf.mxu0
    %v407 = vadd.f32 %v302, %v406
    %v408 = vpop.f32.mrf.mxu0
    %v409 = vadd.f32 %v302, %v408
    %410 = vmatmul.bf16.gmra.mxu0 %v278
    %v411 = vpop.f32.mrf.mxu0
    %v412 = vadd.f32 %v302, %v411
    %v413 = vpop.f32.mrf.mxu0
    %v414 = vadd.f32 %v302, %v413
    %415 = vmatmul.bf16.gmra.mxu0 %v279
    %v416 = vpop.f32.mrf.mxu0
    %v417 = vadd.f32 %v302, %v416
    %v418 = vpop.f32.mrf.mxu0
    %v419 = vadd.f32 %v302, %v418
    %420 = vmatmul.bf16.gmra.mxu0 %v280
    %v421 = vpop.f32.mrf.mxu0
    %v422 = vadd.f32 %v302, %v421
    %v423 = vpop.f32.mrf.mxu0
    %v424 = vadd.f32 %v302, %v423
    %425 = vmatmul.bf16.gmra.mxu0 %v281
    %v426 = vpop.f32.mrf.mxu0
    %v427 = vadd.f32 %v302, %v426
    %v428 = vpop.f32.mrf.mxu0
    %v429 = vadd.f32 %v302, %v428
    %430 = vmatmul.bf16.gmra.mxu0 %v282
    %v431 = vpop.f32.mrf.mxu0
    %v432 = vadd.f32 %v302, %v431
    %v433 = vpop.f32.mrf.mxu0
    %v434 = vadd.f32 %v302, %v433
    %435 = vmatmul.bf16.gmra.mxu0 %v283
    %v436 = vpop.f32.mrf.mxu0
    %v437 = vadd.f32 %v302, %v436
    %v438 = vpop.f32.mrf.mxu0
    %v439 = vadd.f32 %v302, %v438
    %440 = vdwg.mxu0
    %v441 = vmax.f32 %v362, 0.0
    %v442 = vmax.f32 %v364, 0.0
    %v443 = vmax.f32 %v367, 0.0
    %v444 = vmax.f32 %v369, 0.0
    %v445 = vmax.f32 %v372, 0.0
    %v446 = vmax.f32 %v374, 0.0
    %v447 = vmax.f32 %v377, 0.0
    %v448 = vmax.f32 %v379, 0.0
    %v449 = vmax.f32 %v382, 0.0
    %v450 = vmax.f32 %v384, 0.0
    %v451 = vmax.f32 %v387, 0.0
    %v452 = vmax.f32 %v389, 0.0
    %v453 = vmax.f32 %v392, 0.0
    %v454 = vmax.f32 %v394, 0.0
    %v455 = vmax.f32 %v397, 0.0
    %v456 = vmax.f32 %v399, 0.0
    %v457 = vmax.f32 %v402, 0.0
    %v458 = vmax.f32 %v404, 0.0
    %v459 = vmax.f32 %v407, 0.0
    %v460 = vmax.f32 %v409, 0.0
    %v461 = vmax.f32 %v412, 0.0
    %v462 = vmax.f32 %v414, 0.0
    %v463 = vmax.f32 %v417, 0.0
    %v464 = vmax.f32 %v419, 0.0
    %v465 = vmax.f32 %v422, 0.0
    %v466 = vmax.f32 %v424, 0.0
    %v467 = vmax.f32 %v427, 0.0
    %v468 = vmax.f32 %v429, 0.0
    %v469 = vmax.f32 %v432, 0.0
    %v470 = vmax.f32 %v434, 0.0
    %v471 = vmax.f32 %v437, 0.0
    %v472 = vmax.f32 %v439, 0.0
    %v473 = vpack.c.bf16 %v442, %v441
    %v474 = vpack.c.bf16 %v444, %v443
    %v475 = vpack.c.bf16 %v446, %v445
    %v476 = vpack.c.bf16 %v448, %v447
    %v477 = vpack.c.bf16 %v450, %v449
    %v478 = vpack.c.bf16 %v452, %v451
    %v479 = vpack.c.bf16 %v454, %v453
    %v480 = vpack.c.bf16 %v456, %v455
    %v481 = vpack.c.bf16 %v458, %v457
    %v482 = vpack.c.bf16 %v460, %v459
    %v483 = vpack.c.bf16 %v462, %v461
    %v484 = vpack.c.bf16 %v464, %v463
    %v485 = vpack.c.bf16 %v466, %v465
    %v486 = vpack.c.bf16 %v468, %v467
    %v487 = vpack.c.bf16 %v470, %v469
    %v488 = vpack.c.bf16 %v472, %v471
    %v489 = vld [vmem:[#allocation8] sm:$0xf]
    %v490 = vld [vmem:[#allocation8 + $0x4] sm:$0xf]
    %v491 = vld [vmem:[#allocation8 + $0x8] sm:$0xf]
    %v492 = vld [vmem:[#allocation8 + $0xc] sm:$0xf]
    %v493 = vld [vmem:[#allocation8 + $0x10] sm:$0xf]
    %v494 = vld [vmem:[#allocation8 + $0x14] sm:$0xf]
    %v495 = vld [vmem:[#allocation8 + $0x18] sm:$0xf]
    %v496 = vld [vmem:[#allocation8 + $0x1c] sm:$0xf]
    %v497 = vld [vmem:[#allocation8 + $0x20] sm:$0xf]
    %v498 = vld [vmem:[#allocation8 + $0x24] sm:$0xf]
    %v499 = vld [vmem:[#allocation8 + $0x28] sm:$0xf]
    %v500 = vld [vmem:[#allocation8 + $0x2c] sm:$0xf]
    %v501 = vld [vmem:[#allocation8 + $0x30] sm:$0xf]
    %v502 = vld [vmem:[#allocation8 + $0x34] sm:$0xf]
    %v503 = vld [vmem:[#allocation8 + $0x38] sm:$0xf]
    %v504 = vld [vmem:[#allocation8 + $0x3c] sm:$0xf]
    %v505 = vld [vmem:[%s5] sm:$0x1]
    %v507 = vperm.slane %v505, 0
    %v525 = vunpack.c.l.b16 %v489
    %v526 = vunpack.c.l.b16 %v490
    %v527 = vunpack.c.l.b16 %v491
    %v528 = vunpack.c.l.b16 %v492
    %v529 = vunpack.c.l.b16 %v493
    %v530 = vunpack.c.l.b16 %v494
    %v531 = vunpack.c.l.b16 %v495
    %v532 = vunpack.c.l.b16 %v496
    %v533 = vunpack.c.l.b16 %v497
    %v534 = vunpack.c.l.b16 %v498
    %v535 = vunpack.c.l.b16 %v499
    %v536 = vunpack.c.l.b16 %v500
    %v537 = vunpack.c.l.b16 %v501
    %v538 = vunpack.c.l.b16 %v502
    %v539 = vunpack.c.l.b16 %v503
    %v540 = vunpack.c.l.b16 %v504
    %v541 = vpack.c.b16 %v526, %v525
    %v542 = vpack.c.b16 %v528, %v527
    %v543 = vpack.c.b16 %v530, %v529
    %v544 = vpack.c.b16 %v532, %v531
    %v545 = vpack.c.b16 %v534, %v533
    %v546 = vpack.c.b16 %v536, %v535
    %v547 = vpack.c.b16 %v538, %v537
    %v548 = vpack.c.b16 %v540, %v539
    %557 = vmatpush.bf16.msra.mxu0 %v548
    %558 = vmatpush.bf16.msra.mxu0 %v547
    %559 = vmatpush.bf16.msra.mxu0 %v546
    %560 = vmatpush.bf16.msra.mxu0 %v545
    %561 = vmatpush.bf16.msra.mxu0 %v544
    %562 = vmatpush.bf16.msra.mxu0 %v543
    %563 = vmatpush.bf16.msra.mxu0 %v542
    %564 = vmatpush.bf16.msra.mxu0 %v541
    %565 = vmatmul.bf16.gmra.mxu0 %v473
    %v566 = vpop.f32.mrf.mxu0
    %v567 = vadd.f32 %v507, %v566
    %v568 = vpop.f32.mrf.mxu0
    %v569 = vadd.f32 %v507, %v568
    %570 = vmatmul.bf16.gmra.mxu0 %v474
    %v571 = vpop.f32.mrf.mxu0
    %v572 = vadd.f32 %v507, %v571
    %v573 = vpop.f32.mrf.mxu0
    %v574 = vadd.f32 %v507, %v573
    %575 = vmatmul.bf16.gmra.mxu0 %v475
    %v576 = vpop.f32.mrf.mxu0
    %v577 = vadd.f32 %v507, %v576
    %v578 = vpop.f32.mrf.mxu0
    %v579 = vadd.f32 %v507, %v578
    %580 = vmatmul.bf16.gmra.mxu0 %v476
    %v581 = vpop.f32.mrf.mxu0
    %v582 = vadd.f32 %v507, %v581
    %v583 = vpop.f32.mrf.mxu0
    %v584 = vadd.f32 %v507, %v583
    %585 = vmatmul.bf16.gmra.mxu0 %v477
    %v586 = vpop.f32.mrf.mxu0
    %v587 = vadd.f32 %v507, %v586
    %v588 = vpop.f32.mrf.mxu0
    %v589 = vadd.f32 %v507, %v588
    %590 = vmatmul.bf16.gmra.mxu0 %v478
    %v591 = vpop.f32.mrf.mxu0
    %v592 = vadd.f32 %v507, %v591
    %v593 = vpop.f32.mrf.mxu0
    %v594 = vadd.f32 %v507, %v593
    %595 = vmatmul.bf16.gmra.mxu0 %v479
    %v596 = vpop.f32.mrf.mxu0
    %v597 = vadd.f32 %v507, %v596
    %v598 = vpop.f32.mrf.mxu0
    %v599 = vadd.f32 %v507, %v598
    %600 = vmatmul.bf16.gmra.mxu0 %v480
    %v601 = vpop.f32.mrf.mxu0
    %v602 = vadd.f32 %v507, %v601
    %v603 = vpop.f32.mrf.mxu0
    %v604 = vadd.f32 %v507, %v603
    %605 = vmatmul.bf16.gmra.mxu0 %v481
    %v606 = vpop.f32.mrf.mxu0
    %v607 = vadd.f32 %v507, %v606
    %v608 = vpop.f32.mrf.mxu0
    %v609 = vadd.f32 %v507, %v608
    %610 = vmatmul.bf16.gmra.mxu0 %v482
    %v611 = vpop.f32.mrf.mxu0
    %v612 = vadd.f32 %v507, %v611
    %v613 = vpop.f32.mrf.mxu0
    %v614 = vadd.f32 %v507, %v613
    %615 = vmatmul.bf16.gmra.mxu0 %v483
    %v616 = vpop.f32.mrf.mxu0
    %v617 = vadd.f32 %v507, %v616
    %v618 = vpop.f32.mrf.mxu0
    %v619 = vadd.f32 %v507, %v618
    %620 = vmatmul.bf16.gmra.mxu0 %v484
    %v621 = vpop.f32.mrf.mxu0
    %v622 = vadd.f32 %v507, %v621
    %v623 = vpop.f32.mrf.mxu0
    %v624 = vadd.f32 %v507, %v623
    %625 = vmatmul.bf16.gmra.mxu0 %v485
    %v626 = vpop.f32.mrf.mxu0
    %v627 = vadd.f32 %v507, %v626
    %v628 = vpop.f32.mrf.mxu0
    %v629 = vadd.f32 %v507, %v628
    %630 = vmatmul.bf16.gmra.mxu0 %v486
    %v631 = vpop.f32.mrf.mxu0
    %v632 = vadd.f32 %v507, %v631
    %v633 = vpop.f32.mrf.mxu0
    %v634 = vadd.f32 %v507, %v633
    %635 = vmatmul.bf16.gmra.mxu0 %v487
    %v636 = vpop.f32.mrf.mxu0
    %v637 = vadd.f32 %v507, %v636
    %v638 = vpop.f32.mrf.mxu0
    %v639 = vadd.f32 %v507, %v638
    %640 = vmatmul.bf16.gmra.mxu0 %v488
    %v641 = vpop.f32.mrf.mxu0
    %v642 = vadd.f32 %v507, %v641
    %v643 = vpop.f32.mrf.mxu0
    %v644 = vadd.f32 %v507, %v643
    %645 = vdwg.mxu0
    %v646 = vmax.f32 %v567, 0.0
    %v647 = vmax.f32 %v569, 0.0
    %v648 = vmax.f32 %v572, 0.0
    %v649 = vmax.f32 %v574, 0.0
    %v650 = vmax.f32 %v577, 0.0
    %v651 = vmax.f32 %v579, 0.0
    %v652 = vmax.f32 %v582, 0.0
    %v653 = vmax.f32 %v584, 0.0
    %v654 = vmax.f32 %v587, 0.0
    %v655 = vmax.f32 %v589, 0.0
    %v656 = vmax.f32 %v592, 0.0
    %v657 = vmax.f32 %v594, 0.0
    %v658 = vmax.f32 %v597, 0.0
    %v659 = vmax.f32 %v599, 0.0
    %v660 = vmax.f32 %v602, 0.0
    %v661 = vmax.f32 %v604, 0.0
    %v662 = vmax.f32 %v607, 0.0
    %v663 = vmax.f32 %v609, 0.0
    %v664 = vmax.f32 %v612, 0.0
    %v665 = vmax.f32 %v614, 0.0
    %v666 = vmax.f32 %v617, 0.0
    %v667 = vmax.f32 %v619, 0.0
    %v668 = vmax.f32 %v622, 0.0
    %v669 = vmax.f32 %v624, 0.0
    %v670 = vmax.f32 %v627, 0.0
    %v671 = vmax.f32 %v629, 0.0
    %v672 = vmax.f32 %v632, 0.0
    %v673 = vmax.f32 %v634, 0.0
    %v674 = vmax.f32 %v637, 0.0
    %v675 = vmax.f32 %v639, 0.0
    %v676 = vmax.f32 %v642, 0.0
    %v677 = vmax.f32 %v644, 0.0
    %v678 = vpack.c.bf16 %v647, %v646
    %v679 = vpack.c.bf16 %v649, %v648
    %v680 = vpack.c.bf16 %v651, %v650
    %v681 = vpack.c.bf16 %v653, %v652
    %v682 = vpack.c.bf16 %v655, %v654
    %v683 = vpack.c.bf16 %v657, %v656
    %v684 = vpack.c.bf16 %v659, %v658
    %v685 = vpack.c.bf16 %v661, %v660
    %v686 = vpack.c.bf16 %v663, %v662
    %v687 = vpack.c.bf16 %v665, %v664
    %v688 = vpack.c.bf16 %v667, %v666
    %v689 = vpack.c.bf16 %v669, %v668
    %v690 = vpack.c.bf16 %v671, %v670
    %v691 = vpack.c.bf16 %v673, %v672
    %v692 = vpack.c.bf16 %v675, %v674
    %v693 = vpack.c.bf16 %v677, %v676
    %v694 = vld [vmem:[#allocation10] sm:$0xf]
    %v695 = vld [vmem:[#allocation10 + $0x4] sm:$0xf]
    %v696 = vld [vmem:[#allocation10 + $0x8] sm:$0xf]
    %v697 = vld [vmem:[#allocation10 + $0xc] sm:$0xf]
    %v698 = vld [vmem:[#allocation10 + $0x10] sm:$0xf]
    %v699 = vld [vmem:[#allocation10 + $0x14] sm:$0xf]
    %v700 = vld [vmem:[#allocation10 + $0x18] sm:$0xf]
    %v701 = vld [vmem:[#allocation10 + $0x1c] sm:$0xf]
    %v702 = vld [vmem:[#allocation10 + $0x20] sm:$0xf]
    %v703 = vld [vmem:[#allocation10 + $0x24] sm:$0xf]
    %v704 = vld [vmem:[#allocation10 + $0x28] sm:$0xf]
    %v705 = vld [vmem:[#allocation10 + $0x2c] sm:$0xf]
    %v706 = vld [vmem:[#allocation10 + $0x30] sm:$0xf]
    %v707 = vld [vmem:[#allocation10 + $0x34] sm:$0xf]
    %v708 = vld [vmem:[#allocation10 + $0x38] sm:$0xf]
    %v709 = vld [vmem:[#allocation10 + $0x3c] sm:$0xf]
    %v710 = vld [vmem:[%s7] sm:$0x1]
    %v712 = vperm.slane %v710, 0
    %v730 = vunpack.c.l.b16 %v694
    %v731 = vunpack.c.l.b16 %v695
    %v732 = vunpack.c.l.b16 %v696
    %v733 = vunpack.c.l.b16 %v697
    %v734 = vunpack.c.l.b16 %v698
    %v735 = vunpack.c.l.b16 %v699
    %v736 = vunpack.c.l.b16 %v700
    %v737 = vunpack.c.l.b16 %v701
    %v738 = vunpack.c.l.b16 %v702
    %v739 = vunpack.c.l.b16 %v703
    %v740 = vunpack.c.l.b16 %v704
    %v741 = vunpack.c.l.b16 %v705
    %v742 = vunpack.c.l.b16 %v706
    %v743 = vunpack.c.l.b16 %v707
    %v744 = vunpack.c.l.b16 %v708
    %v745 = vunpack.c.l.b16 %v709
    %v746 = vpack.c.b16 %v731, %v730
    %v747 = vpack.c.b16 %v733, %v732
    %v748 = vpack.c.b16 %v735, %v734
    %v749 = vpack.c.b16 %v737, %v736
    %v750 = vpack.c.b16 %v739, %v738
    %v751 = vpack.c.b16 %v741, %v740
    %v752 = vpack.c.b16 %v743, %v742
    %v753 = vpack.c.b16 %v745, %v744
    %762 = vmatpush.bf16.msra.mxu0 %v753
    %763 = vmatpush.bf16.msra.mxu0 %v752
    %764 = vmatpush.bf16.msra.mxu0 %v751
    %765 = vmatpush.bf16.msra.mxu0 %v750
    %766 = vmatpush.bf16.msra.mxu0 %v749
    %767 = vmatpush.bf16.msra.mxu0 %v748
    %768 = vmatpush.bf16.msra.mxu0 %v747
    %769 = vmatpush.bf16.msra.mxu0 %v746
    %770 = vmatmul.bf16.gmra.mxu0 %v678
    %v771 = vpop.f32.mrf.mxu0
    %v772 = vadd.f32 %v712, %v771
    %v773 = vpop.f32.mrf.mxu0
    %v774 = vadd.f32 %v712, %v773
    %775 = vmatmul.bf16.gmra.mxu0 %v679
    %v776 = vpop.f32.mrf.mxu0
    %v777 = vadd.f32 %v712, %v776
    %v778 = vpop.f32.mrf.mxu0
    %v779 = vadd.f32 %v712, %v778
    %780 = vmatmul.bf16.gmra.mxu0 %v680
    %v781 = vpop.f32.mrf.mxu0
    %v782 = vadd.f32 %v712, %v781
    %v783 = vpop.f32.mrf.mxu0
    %v784 = vadd.f32 %v712, %v783
    %785 = vmatmul.bf16.gmra.mxu0 %v681
    %v786 = vpop.f32.mrf.mxu0
    %v787 = vadd.f32 %v712, %v786
    %v788 = vpop.f32.mrf.mxu0
    %v789 = vadd.f32 %v712, %v788
    %790 = vmatmul.bf16.gmra.mxu0 %v682
    %v791 = vpop.f32.mrf.mxu0
    %v792 = vadd.f32 %v712, %v791
    %v793 = vpop.f32.mrf.mxu0
    %v794 = vadd.f32 %v712, %v793
    %795 = vmatmul.bf16.gmra.mxu0 %v683
    %v796 = vpop.f32.mrf.mxu0
    %v797 = vadd.f32 %v712, %v796
    %v798 = vpop.f32.mrf.mxu0
    %v799 = vadd.f32 %v712, %v798
    %800 = vmatmul.bf16.gmra.mxu0 %v684
    %v801 = vpop.f32.mrf.mxu0
    %v802 = vadd.f32 %v712, %v801
    %v803 = vpop.f32.mrf.mxu0
    %v804 = vadd.f32 %v712, %v803
    %805 = vmatmul.bf16.gmra.mxu0 %v685
    %v806 = vpop.f32.mrf.mxu0
    %v807 = vadd.f32 %v712, %v806
    %v808 = vpop.f32.mrf.mxu0
    %v809 = vadd.f32 %v712, %v808
    %810 = vmatmul.bf16.gmra.mxu0 %v686
    %v811 = vpop.f32.mrf.mxu0
    %v812 = vadd.f32 %v712, %v811
    %v813 = vpop.f32.mrf.mxu0
    %v814 = vadd.f32 %v712, %v813
    %815 = vmatmul.bf16.gmra.mxu0 %v687
    %v816 = vpop.f32.mrf.mxu0
    %v817 = vadd.f32 %v712, %v816
    %v818 = vpop.f32.mrf.mxu0
    %v819 = vadd.f32 %v712, %v818
    %820 = vmatmul.bf16.gmra.mxu0 %v688
    %v821 = vpop.f32.mrf.mxu0
    %v822 = vadd.f32 %v712, %v821
    %v823 = vpop.f32.mrf.mxu0
    %v824 = vadd.f32 %v712, %v823
    %825 = vmatmul.bf16.gmra.mxu0 %v689
    %v826 = vpop.f32.mrf.mxu0
    %v827 = vadd.f32 %v712, %v826
    %v828 = vpop.f32.mrf.mxu0
    %v829 = vadd.f32 %v712, %v828
    %830 = vmatmul.bf16.gmra.mxu0 %v690
    %v831 = vpop.f32.mrf.mxu0
    %v832 = vadd.f32 %v712, %v831
    %v833 = vpop.f32.mrf.mxu0
    %v834 = vadd.f32 %v712, %v833
    %835 = vmatmul.bf16.gmra.mxu0 %v691
    %v836 = vpop.f32.mrf.mxu0
    %v837 = vadd.f32 %v712, %v836
    %v838 = vpop.f32.mrf.mxu0
    %v839 = vadd.f32 %v712, %v838
    %840 = vmatmul.bf16.gmra.mxu0 %v692
    %v841 = vpop.f32.mrf.mxu0
    %v842 = vadd.f32 %v712, %v841
    %v843 = vpop.f32.mrf.mxu0
    %v844 = vadd.f32 %v712, %v843
    %845 = vmatmul.bf16.gmra.mxu0 %v693
    %v846 = vpop.f32.mrf.mxu0
    %v847 = vadd.f32 %v712, %v846
    %v848 = vpop.f32.mrf.mxu0
    %v849 = vadd.f32 %v712, %v848
    %850 = vdwg.mxu0
    %v851 = vsub.f32 0.0, %v772
    %v852 = vsub.f32 0.0, %v774
    %v853 = vsub.f32 0.0, %v777
    %v854 = vsub.f32 0.0, %v779
    %v855 = vsub.f32 0.0, %v782
    %v856 = vsub.f32 0.0, %v784
    %v857 = vsub.f32 0.0, %v787
    %v858 = vsub.f32 0.0, %v789
    %v859 = vsub.f32 0.0, %v792
    %v860 = vsub.f32 0.0, %v794
    %v861 = vsub.f32 0.0, %v797
    %v862 = vsub.f32 0.0, %v799
    %v863 = vsub.f32 0.0, %v802
    %v864 = vsub.f32 0.0, %v804
    %v865 = vsub.f32 0.0, %v807
    %v866 = vsub.f32 0.0, %v809
    %v867 = vsub.f32 0.0, %v812
    %v868 = vsub.f32 0.0, %v814
    %v869 = vsub.f32 0.0, %v817
    %v870 = vsub.f32 0.0, %v819
    %v871 = vsub.f32 0.0, %v822
    %v872 = vsub.f32 0.0, %v824
    %v873 = vsub.f32 0.0, %v827
    %v874 = vsub.f32 0.0, %v829
    %v875 = vsub.f32 0.0, %v832
    %v876 = vsub.f32 0.0, %v834
    %v877 = vsub.f32 0.0, %v837
    %v878 = vsub.f32 0.0, %v839
    %v879 = vsub.f32 0.0, %v842
    %v880 = vsub.f32 0.0, %v844
    %v881 = vsub.f32 0.0, %v847
    %v882 = vsub.f32 0.0, %v849
    %v883 = vmul.f32 %v851, 1.442695
    %v884 = vpow.pop %v883
    %v885 = vmul.f32 %v852, 1.442695
    %v886 = vpow.pop %v885
    %v887 = vmul.f32 %v853, 1.442695
    %v888 = vpow.pop %v887
    %v889 = vmul.f32 %v854, 1.442695
    %v890 = vpow.pop %v889
    %v891 = vmul.f32 %v855, 1.442695
    %v892 = vpow.pop %v891
    %v893 = vmul.f32 %v856, 1.442695
    %v894 = vpow.pop %v893
    %v895 = vmul.f32 %v857, 1.442695
    %v896 = vpow.pop %v895
    %v897 = vmul.f32 %v858, 1.442695
    %v898 = vpow.pop %v897
    %v899 = vmul.f32 %v859, 1.442695
    %v900 = vpow.pop %v899
    %v901 = vmul.f32 %v860, 1.442695
    %v902 = vpow.pop %v901
    %v903 = vmul.f32 %v861, 1.442695
    %v904 = vpow.pop %v903
    %v905 = vmul.f32 %v862, 1.442695
    %v906 = vpow.pop %v905
    %v907 = vmul.f32 %v863, 1.442695
    %v908 = vpow.pop %v907
    %v909 = vmul.f32 %v864, 1.442695
    %v910 = vpow.pop %v909
    %v911 = vmul.f32 %v865, 1.442695
    %v912 = vpow.pop %v911
    %v913 = vmul.f32 %v866, 1.442695
    %v914 = vpow.pop %v913
    %v915 = vmul.f32 %v867, 1.442695
    %v916 = vpow.pop %v915
    %v917 = vmul.f32 %v868, 1.442695
    %v918 = vpow.pop %v917
    %v919 = vmul.f32 %v869, 1.442695
    %v920 = vpow.pop %v919
    %v921 = vmul.f32 %v870, 1.442695
    %v922 = vpow.pop %v921
    %v923 = vmul.f32 %v871, 1.442695
    %v924 = vpow.pop %v923
    %v925 = vmul.f32 %v872, 1.442695
    %v926 = vpow.pop %v925
    %v927 = vmul.f32 %v873, 1.442695
    %v928 = vpow.pop %v927
    %v929 = vmul.f32 %v874, 1.442695
    %v930 = vpow.pop %v929
    %v931 = vmul.f32 %v875, 1.442695
    %v932 = vpow.pop %v931
    %v933 = vmul.f32 %v876, 1.442695
    %v934 = vpow.pop %v933
    %v935 = vmul.f32 %v877, 1.442695
    %v936 = vpow.pop %v935
    %v937 = vmul.f32 %v878, 1.442695
    %v938 = vpow.pop %v937
    %v939 = vmul.f32 %v879, 1.442695
    %v940 = vpow.pop %v939
    %v941 = vmul.f32 %v880, 1.442695
    %v942 = vpow.pop %v941
    %v943 = vmul.f32 %v881, 1.442695
    %v944 = vpow.pop %v943
    %v945 = vmul.f32 %v882, 1.442695
    %v946 = vpow.pop %v945
    %v947 = vadd.f32 %v884, 1.0
    %v948 = vadd.f32 %v886, 1.0
    %v949 = vadd.f32 %v888, 1.0
    %v950 = vadd.f32 %v890, 1.0
    %v951 = vadd.f32 %v892, 1.0
    %v952 = vadd.f32 %v894, 1.0
    %v953 = vadd.f32 %v896, 1.0
    %v954 = vadd.f32 %v898, 1.0
    %v955 = vadd.f32 %v900, 1.0
    %v956 = vadd.f32 %v902, 1.0
    %v957 = vadd.f32 %v904, 1.0
    %v958 = vadd.f32 %v906, 1.0
    %v959 = vadd.f32 %v908, 1.0
    %v960 = vadd.f32 %v910, 1.0
    %v961 = vadd.f32 %v912, 1.0
    %v962 = vadd.f32 %v914, 1.0
    %v963 = vadd.f32 %v916, 1.0
    %v964 = vadd.f32 %v918, 1.0
    %v965 = vadd.f32 %v920, 1.0
    %v966 = vadd.f32 %v922, 1.0
    %v967 = vadd.f32 %v924, 1.0
    %v968 = vadd.f32 %v926, 1.0
    %v969 = vadd.f32 %v928, 1.0
    %v970 = vadd.f32 %v930, 1.0
    %v971 = vadd.f32 %v932, 1.0
    %v972 = vadd.f32 %v934, 1.0
    %v973 = vadd.f32 %v936, 1.0
    %v974 = vadd.f32 %v938, 1.0
    %v975 = vadd.f32 %v940, 1.0
    %v976 = vadd.f32 %v942, 1.0
    %v977 = vadd.f32 %v944, 1.0
    %v978 = vadd.f32 %v946, 1.0
    %v979 = vrcp.pop %v947
    %v980 = vmul.f32 %v947, %v979
    %v981 = vsub.f32 1.0, %v980
    %v982 = vmul.f32 %v979, %v981
    %v983 = vadd.f32 %v979, %v982
    %vm984 = vweird.f32 %v947
    %vm985 = vweird.f32 %v979
    %vm986 = vmor %vm984, %vm985
    %v987 = vsel %vm986, %v979, %v983
    %v988 = vand.u32 2147483647, %v947
    %vm989 = vcmp.eq.f32.partialorder %v988, 8.507059e+37
    %v990 = vand.u32 %v947, 2147483648
    %v991 = vor.u32 1.1754944e-38, %v990
    %v992 = vsel %vm989, %v991, %v987
    %v993 = vmul.f32 1.0, %v992
    %v994 = vrcp.pop %v948
    %v995 = vmul.f32 %v948, %v994
    %v996 = vsub.f32 1.0, %v995
    %v997 = vmul.f32 %v994, %v996
    %v998 = vadd.f32 %v994, %v997
    %vm999 = vweird.f32 %v948
    %vm1000 = vweird.f32 %v994
    %vm1001 = vmor %vm999, %vm1000
    %v1002 = vsel %vm1001, %v994, %v998
    %v1003 = vand.u32 2147483647, %v948
    %vm1004 = vcmp.eq.f32.partialorder %v1003, 8.507059e+37
    %v1005 = vand.u32 %v948, 2147483648
    %v1006 = vor.u32 1.1754944e-38, %v1005
    %v1007 = vsel %vm1004, %v1006, %v1002
    %v1008 = vmul.f32 1.0, %v1007
    %v1009 = vrcp.pop %v949
    %v1010 = vmul.f32 %v949, %v1009
    %v1011 = vsub.f32 1.0, %v1010
    %v1012 = vmul.f32 %v1009, %v1011
    %v1013 = vadd.f32 %v1009, %v1012
    %vm1014 = vweird.f32 %v949
    %vm1015 = vweird.f32 %v1009
    %vm1016 = vmor %vm1014, %vm1015
    %v1017 = vsel %vm1016, %v1009, %v1013
    %v1018 = vand.u32 2147483647, %v949
    %vm1019 = vcmp.eq.f32.partialorder %v1018, 8.507059e+37
    %v1020 = vand.u32 %v949, 2147483648
    %v1021 = vor.u32 1.1754944e-38, %v1020
    %v1022 = vsel %vm1019, %v1021, %v1017
    %v1023 = vmul.f32 1.0, %v1022
    %v1024 = vrcp.pop %v950
    %v1025 = vmul.f32 %v950, %v1024
    %v1026 = vsub.f32 1.0, %v1025
    %v1027 = vmul.f32 %v1024, %v1026
    %v1028 = vadd.f32 %v1024, %v1027
    %vm1029 = vweird.f32 %v950
    %vm1030 = vweird.f32 %v1024
    %vm1031 = vmor %vm1029, %vm1030
    %v1032 = vsel %vm1031, %v1024, %v1028
    %v1033 = vand.u32 2147483647, %v950
    %vm1034 = vcmp.eq.f32.partialorder %v1033, 8.507059e+37
    %v1035 = vand.u32 %v950, 2147483648
    %v1036 = vor.u32 1.1754944e-38, %v1035
    %v1037 = vsel %vm1034, %v1036, %v1032
    %v1038 = vmul.f32 1.0, %v1037
    %v1039 = vrcp.pop %v951
    %v1040 = vmul.f32 %v951, %v1039
    %v1041 = vsub.f32 1.0, %v1040
    %v1042 = vmul.f32 %v1039, %v1041
    %v1043 = vadd.f32 %v1039, %v1042
    %vm1044 = vweird.f32 %v951
    %vm1045 = vweird.f32 %v1039
    %vm1046 = vmor %vm1044, %vm1045
    %v1047 = vsel %vm1046, %v1039, %v1043
    %v1048 = vand.u32 2147483647, %v951
    %vm1049 = vcmp.eq.f32.partialorder %v1048, 8.507059e+37
    %v1050 = vand.u32 %v951, 2147483648
    %v1051 = vor.u32 1.1754944e-38, %v1050
    %v1052 = vsel %vm1049, %v1051, %v1047
    %v1053 = vmul.f32 1.0, %v1052
    %v1054 = vrcp.pop %v952
    %v1055 = vmul.f32 %v952, %v1054
    %v1056 = vsub.f32 1.0, %v1055
    %v1057 = vmul.f32 %v1054, %v1056
    %v1058 = vadd.f32 %v1054, %v1057
    %vm1059 = vweird.f32 %v952
    %vm1060 = vweird.f32 %v1054
    %vm1061 = vmor %vm1059, %vm1060
    %v1062 = vsel %vm1061, %v1054, %v1058
    %v1063 = vand.u32 2147483647, %v952
    %vm1064 = vcmp.eq.f32.partialorder %v1063, 8.507059e+37
    %v1065 = vand.u32 %v952, 2147483648
    %v1066 = vor.u32 1.1754944e-38, %v1065
    %v1067 = vsel %vm1064, %v1066, %v1062
    %v1068 = vmul.f32 1.0, %v1067
    %v1069 = vrcp.pop %v953
    %v1070 = vmul.f32 %v953, %v1069
    %v1071 = vsub.f32 1.0, %v1070
    %v1072 = vmul.f32 %v1069, %v1071
    %v1073 = vadd.f32 %v1069, %v1072
    %vm1074 = vweird.f32 %v953
    %vm1075 = vweird.f32 %v1069
    %vm1076 = vmor %vm1074, %vm1075
    %v1077 = vsel %vm1076, %v1069, %v1073
    %v1078 = vand.u32 2147483647, %v953
    %vm1079 = vcmp.eq.f32.partialorder %v1078, 8.507059e+37
    %v1080 = vand.u32 %v953, 2147483648
    %v1081 = vor.u32 1.1754944e-38, %v1080
    %v1082 = vsel %vm1079, %v1081, %v1077
    %v1083 = vmul.f32 1.0, %v1082
    %v1084 = vrcp.pop %v954
    %v1085 = vmul.f32 %v954, %v1084
    %v1086 = vsub.f32 1.0, %v1085
    %v1087 = vmul.f32 %v1084, %v1086
    %v1088 = vadd.f32 %v1084, %v1087
    %vm1089 = vweird.f32 %v954
    %vm1090 = vweird.f32 %v1084
    %vm1091 = vmor %vm1089, %vm1090
    %v1092 = vsel %vm1091, %v1084, %v1088
    %v1093 = vand.u32 2147483647, %v954
    %vm1094 = vcmp.eq.f32.partialorder %v1093, 8.507059e+37
    %v1095 = vand.u32 %v954, 2147483648
    %v1096 = vor.u32 1.1754944e-38, %v1095
    %v1097 = vsel %vm1094, %v1096, %v1092
    %v1098 = vmul.f32 1.0, %v1097
    %v1099 = vrcp.pop %v955
    %v1100 = vmul.f32 %v955, %v1099
    %v1101 = vsub.f32 1.0, %v1100
    %v1102 = vmul.f32 %v1099, %v1101
    %v1103 = vadd.f32 %v1099, %v1102
    %vm1104 = vweird.f32 %v955
    %vm1105 = vweird.f32 %v1099
    %vm1106 = vmor %vm1104, %vm1105
    %v1107 = vsel %vm1106, %v1099, %v1103
    %v1108 = vand.u32 2147483647, %v955
    %vm1109 = vcmp.eq.f32.partialorder %v1108, 8.507059e+37
    %v1110 = vand.u32 %v955, 2147483648
    %v1111 = vor.u32 1.1754944e-38, %v1110
    %v1112 = vsel %vm1109, %v1111, %v1107
    %v1113 = vmul.f32 1.0, %v1112
    %v1114 = vrcp.pop %v956
    %v1115 = vmul.f32 %v956, %v1114
    %v1116 = vsub.f32 1.0, %v1115
    %v1117 = vmul.f32 %v1114, %v1116
    %v1118 = vadd.f32 %v1114, %v1117
    %vm1119 = vweird.f32 %v956
    %vm1120 = vweird.f32 %v1114
    %vm1121 = vmor %vm1119, %vm1120
    %v1122 = vsel %vm1121, %v1114, %v1118
    %v1123 = vand.u32 2147483647, %v956
    %vm1124 = vcmp.eq.f32.partialorder %v1123, 8.507059e+37
    %v1125 = vand.u32 %v956, 2147483648
    %v1126 = vor.u32 1.1754944e-38, %v1125
    %v1127 = vsel %vm1124, %v1126, %v1122
    %v1128 = vmul.f32 1.0, %v1127
    %v1129 = vrcp.pop %v957
    %v1130 = vmul.f32 %v957, %v1129
    %v1131 = vsub.f32 1.0, %v1130
    %v1132 = vmul.f32 %v1129, %v1131
    %v1133 = vadd.f32 %v1129, %v1132
    %vm1134 = vweird.f32 %v957
    %vm1135 = vweird.f32 %v1129
    %vm1136 = vmor %vm1134, %vm1135
    %v1137 = vsel %vm1136, %v1129, %v1133
    %v1138 = vand.u32 2147483647, %v957
    %vm1139 = vcmp.eq.f32.partialorder %v1138, 8.507059e+37
    %v1140 = vand.u32 %v957, 2147483648
    %v1141 = vor.u32 1.1754944e-38, %v1140
    %v1142 = vsel %vm1139, %v1141, %v1137
    %v1143 = vmul.f32 1.0, %v1142
    %v1144 = vrcp.pop %v958
    %v1145 = vmul.f32 %v958, %v1144
    %v1146 = vsub.f32 1.0, %v1145
    %v1147 = vmul.f32 %v1144, %v1146
    %v1148 = vadd.f32 %v1144, %v1147
    %vm1149 = vweird.f32 %v958
    %vm1150 = vweird.f32 %v1144
    %vm1151 = vmor %vm1149, %vm1150
    %v1152 = vsel %vm1151, %v1144, %v1148
    %v1153 = vand.u32 2147483647, %v958
    %vm1154 = vcmp.eq.f32.partialorder %v1153, 8.507059e+37
    %v1155 = vand.u32 %v958, 2147483648
    %v1156 = vor.u32 1.1754944e-38, %v1155
    %v1157 = vsel %vm1154, %v1156, %v1152
    %v1158 = vmul.f32 1.0, %v1157
    %v1159 = vrcp.pop %v959
    %v1160 = vmul.f32 %v959, %v1159
    %v1161 = vsub.f32 1.0, %v1160
    %v1162 = vmul.f32 %v1159, %v1161
    %v1163 = vadd.f32 %v1159, %v1162
    %vm1164 = vweird.f32 %v959
    %vm1165 = vweird.f32 %v1159
    %vm1166 = vmor %vm1164, %vm1165
    %v1167 = vsel %vm1166, %v1159, %v1163
    %v1168 = vand.u32 2147483647, %v959
    %vm1169 = vcmp.eq.f32.partialorder %v1168, 8.507059e+37
    %v1170 = vand.u32 %v959, 2147483648
    %v1171 = vor.u32 1.1754944e-38, %v1170
    %v1172 = vsel %vm1169, %v1171, %v1167
    %v1173 = vmul.f32 1.0, %v1172
    %v1174 = vrcp.pop %v960
    %v1175 = vmul.f32 %v960, %v1174
    %v1176 = vsub.f32 1.0, %v1175
    %v1177 = vmul.f32 %v1174, %v1176
    %v1178 = vadd.f32 %v1174, %v1177
    %vm1179 = vweird.f32 %v960
    %vm1180 = vweird.f32 %v1174
    %vm1181 = vmor %vm1179, %vm1180
    %v1182 = vsel %vm1181, %v1174, %v1178
    %v1183 = vand.u32 2147483647, %v960
    %vm1184 = vcmp.eq.f32.partialorder %v1183, 8.507059e+37
    %v1185 = vand.u32 %v960, 2147483648
    %v1186 = vor.u32 1.1754944e-38, %v1185
    %v1187 = vsel %vm1184, %v1186, %v1182
    %v1188 = vmul.f32 1.0, %v1187
    %v1189 = vrcp.pop %v961
    %v1190 = vmul.f32 %v961, %v1189
    %v1191 = vsub.f32 1.0, %v1190
    %v1192 = vmul.f32 %v1189, %v1191
    %v1193 = vadd.f32 %v1189, %v1192
    %vm1194 = vweird.f32 %v961
    %vm1195 = vweird.f32 %v1189
    %vm1196 = vmor %vm1194, %vm1195
    %v1197 = vsel %vm1196, %v1189, %v1193
    %v1198 = vand.u32 2147483647, %v961
    %vm1199 = vcmp.eq.f32.partialorder %v1198, 8.507059e+37
    %v1200 = vand.u32 %v961, 2147483648
    %v1201 = vor.u32 1.1754944e-38, %v1200
    %v1202 = vsel %vm1199, %v1201, %v1197
    %v1203 = vmul.f32 1.0, %v1202
    %v1204 = vrcp.pop %v962
    %v1205 = vmul.f32 %v962, %v1204
    %v1206 = vsub.f32 1.0, %v1205
    %v1207 = vmul.f32 %v1204, %v1206
    %v1208 = vadd.f32 %v1204, %v1207
    %vm1209 = vweird.f32 %v962
    %vm1210 = vweird.f32 %v1204
    %vm1211 = vmor %vm1209, %vm1210
    %v1212 = vsel %vm1211, %v1204, %v1208
    %v1213 = vand.u32 2147483647, %v962
    %vm1214 = vcmp.eq.f32.partialorder %v1213, 8.507059e+37
    %v1215 = vand.u32 %v962, 2147483648
    %v1216 = vor.u32 1.1754944e-38, %v1215
    %v1217 = vsel %vm1214, %v1216, %v1212
    %v1218 = vmul.f32 1.0, %v1217
    %v1219 = vrcp.pop %v963
    %v1220 = vmul.f32 %v963, %v1219
    %v1221 = vsub.f32 1.0, %v1220
    %v1222 = vmul.f32 %v1219, %v1221
    %v1223 = vadd.f32 %v1219, %v1222
    %vm1224 = vweird.f32 %v963
    %vm1225 = vweird.f32 %v1219
    %vm1226 = vmor %vm1224, %vm1225
    %v1227 = vsel %vm1226, %v1219, %v1223
    %v1228 = vand.u32 2147483647, %v963
    %vm1229 = vcmp.eq.f32.partialorder %v1228, 8.507059e+37
    %v1230 = vand.u32 %v963, 2147483648
    %v1231 = vor.u32 1.1754944e-38, %v1230
    %v1232 = vsel %vm1229, %v1231, %v1227
    %v1233 = vmul.f32 1.0, %v1232
    %v1234 = vrcp.pop %v964
    %v1235 = vmul.f32 %v964, %v1234
    %v1236 = vsub.f32 1.0, %v1235
    %v1237 = vmul.f32 %v1234, %v1236
    %v1238 = vadd.f32 %v1234, %v1237
    %vm1239 = vweird.f32 %v964
    %vm1240 = vweird.f32 %v1234
    %vm1241 = vmor %vm1239, %vm1240
    %v1242 = vsel %vm1241, %v1234, %v1238
    %v1243 = vand.u32 2147483647, %v964
    %vm1244 = vcmp.eq.f32.partialorder %v1243, 8.507059e+37
    %v1245 = vand.u32 %v964, 2147483648
    %v1246 = vor.u32 1.1754944e-38, %v1245
    %v1247 = vsel %vm1244, %v1246, %v1242
    %v1248 = vmul.f32 1.0, %v1247
    %v1249 = vrcp.pop %v965
    %v1250 = vmul.f32 %v965, %v1249
    %v1251 = vsub.f32 1.0, %v1250
    %v1252 = vmul.f32 %v1249, %v1251
    %v1253 = vadd.f32 %v1249, %v1252
    %vm1254 = vweird.f32 %v965
    %vm1255 = vweird.f32 %v1249
    %vm1256 = vmor %vm1254, %vm1255
    %v1257 = vsel %vm1256, %v1249, %v1253
    %v1258 = vand.u32 2147483647, %v965
    %vm1259 = vcmp.eq.f32.partialorder %v1258, 8.507059e+37
    %v1260 = vand.u32 %v965, 2147483648
    %v1261 = vor.u32 1.1754944e-38, %v1260
    %v1262 = vsel %vm1259, %v1261, %v1257
    %v1263 = vmul.f32 1.0, %v1262
    %v1264 = vrcp.pop %v966
    %v1265 = vmul.f32 %v966, %v1264
    %v1266 = vsub.f32 1.0, %v1265
    %v1267 = vmul.f32 %v1264, %v1266
    %v1268 = vadd.f32 %v1264, %v1267
    %vm1269 = vweird.f32 %v966
    %vm1270 = vweird.f32 %v1264
    %vm1271 = vmor %vm1269, %vm1270
    %v1272 = vsel %vm1271, %v1264, %v1268
    %v1273 = vand.u32 2147483647, %v966
    %vm1274 = vcmp.eq.f32.partialorder %v1273, 8.507059e+37
    %v1275 = vand.u32 %v966, 2147483648
    %v1276 = vor.u32 1.1754944e-38, %v1275
    %v1277 = vsel %vm1274, %v1276, %v1272
    %v1278 = vmul.f32 1.0, %v1277
    %v1279 = vrcp.pop %v967
    %v1280 = vmul.f32 %v967, %v1279
    %v1281 = vsub.f32 1.0, %v1280
    %v1282 = vmul.f32 %v1279, %v1281
    %v1283 = vadd.f32 %v1279, %v1282
    %vm1284 = vweird.f32 %v967
    %vm1285 = vweird.f32 %v1279
    %vm1286 = vmor %vm1284, %vm1285
    %v1287 = vsel %vm1286, %v1279, %v1283
    %v1288 = vand.u32 2147483647, %v967
    %vm1289 = vcmp.eq.f32.partialorder %v1288, 8.507059e+37
    %v1290 = vand.u32 %v967, 2147483648
    %v1291 = vor.u32 1.1754944e-38, %v1290
    %v1292 = vsel %vm1289, %v1291, %v1287
    %v1293 = vmul.f32 1.0, %v1292
    %v1294 = vrcp.pop %v968
    %v1295 = vmul.f32 %v968, %v1294
    %v1296 = vsub.f32 1.0, %v1295
    %v1297 = vmul.f32 %v1294, %v1296
    %v1298 = vadd.f32 %v1294, %v1297
    %vm1299 = vweird.f32 %v968
    %vm1300 = vweird.f32 %v1294
    %vm1301 = vmor %vm1299, %vm1300
    %v1302 = vsel %vm1301, %v1294, %v1298
    %v1303 = vand.u32 2147483647, %v968
    %vm1304 = vcmp.eq.f32.partialorder %v1303, 8.507059e+37
    %v1305 = vand.u32 %v968, 2147483648
    %v1306 = vor.u32 1.1754944e-38, %v1305
    %v1307 = vsel %vm1304, %v1306, %v1302
    %v1308 = vmul.f32 1.0, %v1307
    %v1309 = vrcp.pop %v969
    %v1310 = vmul.f32 %v969, %v1309
    %v1311 = vsub.f32 1.0, %v1310
    %v1312 = vmul.f32 %v1309, %v1311
    %v1313 = vadd.f32 %v1309, %v1312
    %vm1314 = vweird.f32 %v969
    %vm1315 = vweird.f32 %v1309
    %vm1316 = vmor %vm1314, %vm1315
    %v1317 = vsel %vm1316, %v1309, %v1313
    %v1318 = vand.u32 2147483647, %v969
    %vm1319 = vcmp.eq.f32.partialorder %v1318, 8.507059e+37
    %v1320 = vand.u32 %v969, 2147483648
    %v1321 = vor.u32 1.1754944e-38, %v1320
    %v1322 = vsel %vm1319, %v1321, %v1317
    %v1323 = vmul.f32 1.0, %v1322
    %v1324 = vrcp.pop %v970
    %v1325 = vmul.f32 %v970, %v1324
    %v1326 = vsub.f32 1.0, %v1325
    %v1327 = vmul.f32 %v1324, %v1326
    %v1328 = vadd.f32 %v1324, %v1327
    %vm1329 = vweird.f32 %v970
    %vm1330 = vweird.f32 %v1324
    %vm1331 = vmor %vm1329, %vm1330
    %v1332 = vsel %vm1331, %v1324, %v1328
    %v1333 = vand.u32 2147483647, %v970
    %vm1334 = vcmp.eq.f32.partialorder %v1333, 8.507059e+37
    %v1335 = vand.u32 %v970, 2147483648
    %v1336 = vor.u32 1.1754944e-38, %v1335
    %v1337 = vsel %vm1334, %v1336, %v1332
    %v1338 = vmul.f32 1.0, %v1337
    %v1339 = vrcp.pop %v971
    %v1340 = vmul.f32 %v971, %v1339
    %v1341 = vsub.f32 1.0, %v1340
    %v1342 = vmul.f32 %v1339, %v1341
    %v1343 = vadd.f32 %v1339, %v1342
    %vm1344 = vweird.f32 %v971
    %vm1345 = vweird.f32 %v1339
    %vm1346 = vmor %vm1344, %vm1345
    %v1347 = vsel %vm1346, %v1339, %v1343
    %v1348 = vand.u32 2147483647, %v971
    %vm1349 = vcmp.eq.f32.partialorder %v1348, 8.507059e+37
    %v1350 = vand.u32 %v971, 2147483648
    %v1351 = vor.u32 1.1754944e-38, %v1350
    %v1352 = vsel %vm1349, %v1351, %v1347
    %v1353 = vmul.f32 1.0, %v1352
    %v1354 = vrcp.pop %v972
    %v1355 = vmul.f32 %v972, %v1354
    %v1356 = vsub.f32 1.0, %v1355
    %v1357 = vmul.f32 %v1354, %v1356
    %v1358 = vadd.f32 %v1354, %v1357
    %vm1359 = vweird.f32 %v972
    %vm1360 = vweird.f32 %v1354
    %vm1361 = vmor %vm1359, %vm1360
    %v1362 = vsel %vm1361, %v1354, %v1358
    %v1363 = vand.u32 2147483647, %v972
    %vm1364 = vcmp.eq.f32.partialorder %v1363, 8.507059e+37
    %v1365 = vand.u32 %v972, 2147483648
    %v1366 = vor.u32 1.1754944e-38, %v1365
    %v1367 = vsel %vm1364, %v1366, %v1362
    %v1368 = vmul.f32 1.0, %v1367
    %v1369 = vrcp.pop %v973
    %v1370 = vmul.f32 %v973, %v1369
    %v1371 = vsub.f32 1.0, %v1370
    %v1372 = vmul.f32 %v1369, %v1371
    %v1373 = vadd.f32 %v1369, %v1372
    %vm1374 = vweird.f32 %v973
    %vm1375 = vweird.f32 %v1369
    %vm1376 = vmor %vm1374, %vm1375
    %v1377 = vsel %vm1376, %v1369, %v1373
    %v1378 = vand.u32 2147483647, %v973
    %vm1379 = vcmp.eq.f32.partialorder %v1378, 8.507059e+37
    %v1380 = vand.u32 %v973, 2147483648
    %v1381 = vor.u32 1.1754944e-38, %v1380
    %v1382 = vsel %vm1379, %v1381, %v1377
    %v1383 = vmul.f32 1.0, %v1382
    %v1384 = vrcp.pop %v974
    %v1385 = vmul.f32 %v974, %v1384
    %v1386 = vsub.f32 1.0, %v1385
    %v1387 = vmul.f32 %v1384, %v1386
    %v1388 = vadd.f32 %v1384, %v1387
    %vm1389 = vweird.f32 %v974
    %vm1390 = vweird.f32 %v1384
    %vm1391 = vmor %vm1389, %vm1390
    %v1392 = vsel %vm1391, %v1384, %v1388
    %v1393 = vand.u32 2147483647, %v974
    %vm1394 = vcmp.eq.f32.partialorder %v1393, 8.507059e+37
    %v1395 = vand.u32 %v974, 2147483648
    %v1396 = vor.u32 1.1754944e-38, %v1395
    %v1397 = vsel %vm1394, %v1396, %v1392
    %v1398 = vmul.f32 1.0, %v1397
    %v1399 = vrcp.pop %v975
    %v1400 = vmul.f32 %v975, %v1399
    %v1401 = vsub.f32 1.0, %v1400
    %v1402 = vmul.f32 %v1399, %v1401
    %v1403 = vadd.f32 %v1399, %v1402
    %vm1404 = vweird.f32 %v975
    %vm1405 = vweird.f32 %v1399
    %vm1406 = vmor %vm1404, %vm1405
    %v1407 = vsel %vm1406, %v1399, %v1403
    %v1408 = vand.u32 2147483647, %v975
    %vm1409 = vcmp.eq.f32.partialorder %v1408, 8.507059e+37
    %v1410 = vand.u32 %v975, 2147483648
    %v1411 = vor.u32 1.1754944e-38, %v1410
    %v1412 = vsel %vm1409, %v1411, %v1407
    %v1413 = vmul.f32 1.0, %v1412
    %v1414 = vrcp.pop %v976
    %v1415 = vmul.f32 %v976, %v1414
    %v1416 = vsub.f32 1.0, %v1415
    %v1417 = vmul.f32 %v1414, %v1416
    %v1418 = vadd.f32 %v1414, %v1417
    %vm1419 = vweird.f32 %v976
    %vm1420 = vweird.f32 %v1414
    %vm1421 = vmor %vm1419, %vm1420
    %v1422 = vsel %vm1421, %v1414, %v1418
    %v1423 = vand.u32 2147483647, %v976
    %vm1424 = vcmp.eq.f32.partialorder %v1423, 8.507059e+37
    %v1425 = vand.u32 %v976, 2147483648
    %v1426 = vor.u32 1.1754944e-38, %v1425
    %v1427 = vsel %vm1424, %v1426, %v1422
    %v1428 = vmul.f32 1.0, %v1427
    %v1429 = vrcp.pop %v977
    %v1430 = vmul.f32 %v977, %v1429
    %v1431 = vsub.f32 1.0, %v1430
    %v1432 = vmul.f32 %v1429, %v1431
    %v1433 = vadd.f32 %v1429, %v1432
    %vm1434 = vweird.f32 %v977
    %vm1435 = vweird.f32 %v1429
    %vm1436 = vmor %vm1434, %vm1435
    %v1437 = vsel %vm1436, %v1429, %v1433
    %v1438 = vand.u32 2147483647, %v977
    %vm1439 = vcmp.eq.f32.partialorder %v1438, 8.507059e+37
    %v1440 = vand.u32 %v977, 2147483648
    %v1441 = vor.u32 1.1754944e-38, %v1440
    %v1442 = vsel %vm1439, %v1441, %v1437
    %v1443 = vmul.f32 1.0, %v1442
    %v1444 = vrcp.pop %v978
    %v1445 = vmul.f32 %v978, %v1444
    %v1446 = vsub.f32 1.0, %v1445
    %v1447 = vmul.f32 %v1444, %v1446
    %v1448 = vadd.f32 %v1444, %v1447
    %vm1449 = vweird.f32 %v978
    %vm1450 = vweird.f32 %v1444
    %vm1451 = vmor %vm1449, %vm1450
    %v1452 = vsel %vm1451, %v1444, %v1448
    %v1453 = vand.u32 2147483647, %v978
    %vm1454 = vcmp.eq.f32.partialorder %v1453, 8.507059e+37
    %v1455 = vand.u32 %v978, 2147483648
    %v1456 = vor.u32 1.1754944e-38, %v1455
    %v1457 = vsel %vm1454, %v1456, %v1452
    %v1458 = vmul.f32 1.0, %v1457
    %1459 = vst [vmem:[#allocation11] sm:$0xff] %v993
    %1460 = vst [vmem:[#allocation11 + $0x8] sm:$0xff] %v1008
    %1461 = vst [vmem:[#allocation11 + $0x10] sm:$0xff] %v1023
    %1462 = vst [vmem:[#allocation11 + $0x18] sm:$0xff] %v1038
    %1463 = vst [vmem:[#allocation11 + $0x20] sm:$0xff] %v1053
    %1464 = vst [vmem:[#allocation11 + $0x28] sm:$0xff] %v1068
    %1465 = vst [vmem:[#allocation11 + $0x30] sm:$0xff] %v1083
    %1466 = vst [vmem:[#allocation11 + $0x38] sm:$0xff] %v1098
    %1467 = vst [vmem:[#allocation11 + $0x40] sm:$0xff] %v1113
    %1468 = vst [vmem:[#allocation11 + $0x48] sm:$0xff] %v1128
    %1469 = vst [vmem:[#allocation11 + $0x50] sm:$0xff] %v1143
    %1470 = vst [vmem:[#allocation11 + $0x58] sm:$0xff] %v1158
    %1471 = vst [vmem:[#allocation11 + $0x60] sm:$0xff] %v1173
    %1472 = vst [vmem:[#allocation11 + $0x68] sm:$0xff] %v1188
    %1473 = vst [vmem:[#allocation11 + $0x70] sm:$0xff] %v1203
    %1474 = vst [vmem:[#allocation11 + $0x78] sm:$0xff] %v1218
    %1475 = vst [vmem:[#allocation11 + $0x80] sm:$0xff] %v1233
    %1476 = vst [vmem:[#allocation11 + $0x88] sm:$0xff] %v1248
    %1477 = vst [vmem:[#allocation11 + $0x90] sm:$0xff] %v1263
    %1478 = vst [vmem:[#allocation11 + $0x98] sm:$0xff] %v1278
    %1479 = vst [vmem:[#allocation11 + $0xa0] sm:$0xff] %v1293
    %1480 = vst [vmem:[#allocation11 + $0xa8] sm:$0xff] %v1308
    %1481 = vst [vmem:[#allocation11 + $0xb0] sm:$0xff] %v1323
    %1482 = vst [vmem:[#allocation11 + $0xb8] sm:$0xff] %v1338
    %1483 = vst [vmem:[#allocation11 + $0xc0] sm:$0xff] %v1353
    %1484 = vst [vmem:[#allocation11 + $0xc8] sm:$0xff] %v1368
    %1485 = vst [vmem:[#allocation11 + $0xd0] sm:$0xff] %v1383
    %1486 = vst [vmem:[#allocation11 + $0xd8] sm:$0xff] %v1398
    %1487 = vst [vmem:[#allocation11 + $0xe0] sm:$0xff] %v1413
    %1488 = vst [vmem:[#allocation11 + $0xe8] sm:$0xff] %v1428
    %1489 = vst [vmem:[#allocation11 + $0xf0] sm:$0xff] %v1443
    %1490 = vst [vmem:[#allocation11 + $0xf8] sm:$0xff] %v1458
    // Predicated region
    $region54: #{tpu_custom_call.1} parent=1 // pred_check
      _
    $region55: #{tpu_custom_call.1} parent=1 // pred_check_branch
      %1492 = sbr.rel (0) target = $region57
    $region56: #{tpu_custom_call.1} parent=1 // pred_region
      %1494 = vsyncadd [#allocation4], 0
      %s1495 = sshll.u32 [#allocation11], 4
      %s1496 = int_to_ptr.vmem [resolvable:$true] %s1495
      %s1497 = sshll.u32 %s8, 4
      %s1498 = int_to_ptr.hbm [resolvable:$true] %s1497
      %1503 = dma.vmem_to_hbm [thread:$0]  %s1496, 4096, %s1498, [#allocation4], 128, 128, 8
    $region57: #{tpu_custom_call.1} parent=1 // pred_fallthru
      _
    // Predicated region
    $region58: #{tpu_custom_call.1} parent=1 // pred_check
      _
    $region59: #{tpu_custom_call.1} parent=1 // pred_check_branch
      %1505 = sbr.rel (0) target = $region61
    $region60: #{tpu_custom_call.1} parent=1 // pred_region
      %1507 = dma.done [#allocation4], 4096
    $region61: #{tpu_custom_call.1} parent=1 // pred_fallthru
      _
    %1508 = vsyncpa [#allocation3], 1
    %1509 = vsyncpa [#allocation6], 1
    %1510 = vsyncpa [#allocation9], 1
    %1511 = vsyncpa [#allocation4], 1

</llo_original>
